<compile_context>
chip_gen: v5e
topology: v5e:2x2
jax: 0.10.0
libtpu: 0.0.40
codegen_flags: <defaults>
</compile_context>

<pallas_src>
import functools

import numpy as np

import jax
import jax.numpy as jnp
from jax.experimental import pallas as pl
from jax.experimental.pallas import tpu as pltpu


def _conv_tap_consts(n_batch, H, W, n_rows_padded):
    """Static row offsets + border masks for a 3x3, stride-1, pad-1 conv.

    Rows are pixel-major / image-minor: row = (h*W + w)*n_batch + n.  For tap
    t = kh*3 + kw the source row is (output row) + offsets[t]; masks[t] zeroes
    output rows whose source pixel (h+dh, w+dw) falls outside the image (this
    also covers any shift that would read the trailing padding rows).
    """
    offsets = []
    masks = np.zeros((9, n_rows_padded, 1), np.float32)
    for kh in range(3):
        for kw in range(3):
            t = kh * 3 + kw
            dh, dw = kh - 1, kw - 1
            offsets.append((dh * W + dw) * n_batch)
            for h in range(H):
                for w in range(W):
                    if 0 <= h + dh < H and 0 <= w + dw < W:
                        p = h * W + w
                        masks[t, p * n_batch:(p + 1) * n_batch, 0] = 1.0
    return tuple(offsets), masks


def _fused_demosaic_kernel(mask_ref, x_ref, w1_ref, b1_ref, w2_ref, b2_ref,
                           wf_ref, bf_ref, sel_ref, o_ref, *, offsets):
    Rp = x_ref.shape[0]            # padded rows (pixels * batch, rounded to 8)
    C1 = w1_ref.shape[2]           # 32
    C2 = w2_ref.shape[2]           # 16

    def shift_rows(a, off):
        # out[r] = a[r + off] if 0 <= r + off < Rp else 0  (static slices only)
        if off == 0:
            return a
        z = jnp.zeros((abs(off), a.shape[1]), a.dtype)
        if off > 0:
            return jnp.concatenate([a[off:, :], z], axis=0)
        return jnp.concatenate([z, a[: a.shape[0] + off, :]], axis=0)

    x = x_ref[...]                                              # (Rp, 1) f32
    masks = mask_ref[...]                                       # (9, Rp, 1)

    # ---- conv1 (1 -> 32) + ReLU: 9 shifted broadcast-multiply accumulations.
    acc1 = jnp.zeros((Rp, C1), jnp.float32)
    for t in range(9):
        tap = shift_rows(x, offsets[t]) * masks[t]              # (Rp, 1)
        acc1 = acc1 + tap * w1_ref[t]                           # (Rp,1)*(1,32)
    h1 = jnp.maximum(acc1 + b1_ref[...], 0.0)                   # (Rp, 32)

    # ---- conv2 (32 -> 16) + ReLU: 9 shifted (Rp,32)@(32,16) MXU matmuls.
    acc2 = jnp.zeros((Rp, C2), jnp.float32)
    for t in range(9):
        tap = shift_rows(h1, offsets[t]) * masks[t]             # (Rp, 32)
        acc2 = acc2 + jnp.dot(tap, w2_ref[t],
                              preferred_element_type=jnp.float32)
    h2 = jnp.maximum(acc2 + b2_ref[...], 0.0)                   # (Rp, 16)

    # ---- fc1 (16*25 -> 2), NCHW-flatten order folded into wf_ref:
    #   out[n, o] = sum_r sel[n, r] * sum_c h2[r, c] * wf[o, r, c]
    z0 = jnp.sum(h2 * wf_ref[0], axis=1, keepdims=True)         # (Rp, 1)
    z1 = jnp.sum(h2 * wf_ref[1], axis=1, keepdims=True)         # (Rp, 1)
    z = jnp.concatenate([z0, z1], axis=1)                       # (Rp, 2)
    o_ref[...] = jnp.dot(sel_ref[...], z,
                         preferred_element_type=jnp.float32) + bf_ref[...]


def demosaic_cnn_forward(params, x_nchw):
    N, Cin, H, W = x_nchw.shape
    assert Cin == 1 and H == 5 and W == 5, (N, Cin, H, W)
    HW = H * W
    R = HW * N
    Rp = -(-R // 8) * 8            # pad rows to a sublane multiple
    C1, C2, CO = 32, 16, 2

    offsets, masks_np = _conv_tap_consts(N, H, W, Rp)
    masks = jnp.asarray(masks_np)                                # (9, Rp, 1)

    # Trace-time layout plumbing (tiny).
    # Input: (N,1,5,5) -> pixel-major / image-minor rows, zero-padded to Rp.
    x2d = x_nchw.astype(jnp.float32).reshape(N, HW).T.reshape(R, 1)
    x2d = jnp.pad(x2d, ((0, Rp - R), (0, 0)))
    # conv weights (out,in,kh,kw) -> (tap, cin, cout)
    w1 = jnp.transpose(params["conv1_w"], (2, 3, 1, 0)).reshape(9, 1, C1).astype(jnp.float32)
    w2 = jnp.transpose(params["conv2_w"], (2, 3, 1, 0)).reshape(9, C1, C2).astype(jnp.float32)
    # fc1: torch-flatten feature index is c*25 + p.  Build per-row weights
    # wf[o, r=p*N+n, c] = fc1_w[o, c*25 + p]; padded rows get zero weights.
    wf_pco = params["fc1_w"].reshape(CO, C2, HW).transpose(2, 1, 0).astype(jnp.float32)
    wf_full = jnp.repeat(wf_pco, N, axis=0)                      # (R, C2, CO)
    wf_full = jnp.pad(wf_full, ((0, Rp - R), (0, 0), (0, 0)))    # (Rp, C2, CO)
    wf = jnp.transpose(wf_full, (2, 0, 1))                       # (CO, Rp, C2)
    b1 = params["conv1_b"].reshape(1, C1).astype(jnp.float32)
    b2 = params["conv2_b"].reshape(1, C2).astype(jnp.float32)
    bf = params["fc1_b"].reshape(1, CO).astype(jnp.float32)
    # Batch-select matrix: sel[n, r] = 1 iff row r belongs to image n (r < R).
    sel_np = np.zeros((N, Rp), np.float32)
    for r in range(R):
        sel_np[r % N, r] = 1.0
    sel = jnp.asarray(sel_np)

    kernel = functools.partial(_fused_demosaic_kernel, offsets=offsets)

    # Single-step grid; all operands fit comfortably in VMEM on v5e/v6e/v7x.
    # TODO(synk): if the batch is ever scaled up, tile Rp over a grid axis
    # marked "parallel" (v7x megacore) and re-derive tiles against 64 MiB VMEM.
    return pl.pallas_call(
        kernel,
        out_shape=jax.ShapeDtypeStruct((N, CO), jnp.float32),
        grid=(1,),
        in_specs=[
            pl.BlockSpec((9, Rp, 1), lambda i: (0, 0, 0)),    # tap border masks
            pl.BlockSpec((Rp, 1), lambda i: (0, 0)),          # input pixels
            pl.BlockSpec((9, 1, C1), lambda i: (0, 0, 0)),    # conv1 weight
            pl.BlockSpec((1, C1), lambda i: (0, 0)),          # conv1 bias
            pl.BlockSpec((9, C1, C2), lambda i: (0, 0, 0)),   # conv2 weight
            pl.BlockSpec((1, C2), lambda i: (0, 0)),          # conv2 bias
            pl.BlockSpec((CO, Rp, C2), lambda i: (0, 0, 0)),  # fc1 per-row weights
            pl.BlockSpec((1, CO), lambda i: (0, 0)),          # fc1 bias
            pl.BlockSpec((N, Rp), lambda i: (0, 0)),          # batch-select matrix
        ],
        out_specs=pl.BlockSpec((N, CO), lambda i: (0, 0)),
        compiler_params=pltpu.CompilerParams(
            dimension_semantics=("arbitrary",)),
    )(masks, x2d, w1, b1, w2, b2, wf, bf, sel)


def init_params(key):
    # Deterministic synthetic parameters with PyTorch shapes:
    # conv: (out, in, kh, kw), linear: (out, in).
    k1, k2, k3, k4, k5, k6 = jax.random.split(key, 6)
    return {
        "conv1_w": 0.1 * jax.random.normal(k1, (32, 1, 3, 3), jnp.float32),
        "conv1_b": 0.1 * jax.random.normal(k2, (32,), jnp.float32),
        "conv2_w": 0.1 * jax.random.normal(k3, (16, 32, 3, 3), jnp.float32),
        "conv2_b": 0.1 * jax.random.normal(k4, (16,), jnp.float32),
        "fc1_w": 0.1 * jax.random.normal(k5, (2, 16 * 5 * 5), jnp.float32),
        "fc1_b": 0.1 * jax.random.normal(k6, (2,), jnp.float32),
    }


def reference_forward(params, x_nchw):
    """Pure-JAX reference matching PyTorch semantics, for a correctness check."""
    dn1 = jax.lax.conv_dimension_numbers(
        x_nchw.shape, params["conv1_w"].shape, ("NCHW", "OIHW", "NCHW"))
    h = jax.lax.conv_general_dilated(
        x_nchw, params["conv1_w"], (1, 1), ((1, 1), (1, 1)),
        dimension_numbers=dn1, precision=jax.lax.Precision.HIGHEST)
    h = jax.nn.relu(h + params["conv1_b"][None, :, None, None])
    dn2 = jax.lax.conv_dimension_numbers(
        h.shape, params["conv2_w"].shape, ("NCHW", "OIHW", "NCHW"))
    h = jax.lax.conv_general_dilated(
        h, params["conv2_w"], (1, 1), ((1, 1), (1, 1)),
        dimension_numbers=dn2, precision=jax.lax.Precision.HIGHEST)
    h = jax.nn.relu(h + params["conv2_b"][None, :, None, None])
    h = h.reshape(h.shape[0], -1)
    return jnp.dot(h, params["fc1_w"].T,
                   precision=jax.lax.Precision.HIGHEST) + params["fc1_b"]


if __name__ == "__main__":
    key = jax.random.PRNGKey(0)
    kx, kp = jax.random.split(key)
    params = init_params(kp)
    x = jax.random.normal(kx, (2, 1, 5, 5), jnp.float32)  # (N, C, H, W)

    out = jax.jit(demosaic_cnn_forward)(params, x)
    out = jax.block_until_ready(out)

    ref = reference_forward(params, x)
    assert out.shape == (2, 2), out.shape
    assert bool(jnp.all(jnp.isfinite(out)))
    assert bool(jnp.allclose(out, ref, atol=1e-3, rtol=1e-3)), (out, ref)
    print("KERNEL_OK")
</pallas_src>

<mosaic_0001>
module attributes {stable_mosaic.version = 11 : i64} {
  func.func @_fused_demosaic_kernel(%arg0: i32, %arg1: memref<9x56x1xf32, #tpu.memory_space<vmem>>, %arg2: memref<56x1xf32, #tpu.memory_space<vmem>>, %arg3: memref<9x1x32xf32, #tpu.memory_space<vmem>>, %arg4: memref<1x32xf32, #tpu.memory_space<vmem>>, %arg5: memref<9x32x16xf32, #tpu.memory_space<vmem>>, %arg6: memref<1x16xf32, #tpu.memory_space<vmem>>, %arg7: memref<2x56x16xf32, #tpu.memory_space<vmem>>, %arg8: memref<1x2xf32, #tpu.memory_space<vmem>>, %arg9: memref<2x56xf32, #tpu.memory_space<vmem>>, %arg10: memref<2x2xf32, #tpu.memory_space<vmem>>) attributes {dimension_semantics = [#tpu.dimension_semantics<arbitrary>], iteration_bounds = array<i64: 1>, scalar_prefetch = 0 : i64, scratch_operands = 0 : i64, tpu.core_type = #tpu.core_type<tc>, window_params = [{pipeline_mode = #tpu.pipeline_mode<synchronous>, transform_indices = @transform_0, window_bounds = array<i64: 9, 56, 1>}, {pipeline_mode = #tpu.pipeline_mode<synchronous>, transform_indices = @transform_1, window_bounds = array<i64: 56, 1>}, {pipeline_mode = #tpu.pipeline_mode<synchronous>, transform_indices = @transform_2, window_bounds = array<i64: 9, 1, 32>}, {pipeline_mode = #tpu.pipeline_mode<synchronous>, transform_indices = @transform_3, window_bounds = array<i64: 1, 32>}, {pipeline_mode = #tpu.pipeline_mode<synchronous>, transform_indices = @transform_4, window_bounds = array<i64: 9, 32, 16>}, {pipeline_mode = #tpu.pipeline_mode<synchronous>, transform_indices = @transform_5, window_bounds = array<i64: 1, 16>}, {pipeline_mode = #tpu.pipeline_mode<synchronous>, transform_indices = @transform_6, window_bounds = array<i64: 2, 56, 16>}, {pipeline_mode = #tpu.pipeline_mode<synchronous>, transform_indices = @transform_7, window_bounds = array<i64: 1, 2>}, {pipeline_mode = #tpu.pipeline_mode<synchronous>, transform_indices = @transform_8, window_bounds = array<i64: 2, 56>}, {pipeline_mode = #tpu.pipeline_mode<synchronous>, transform_indices = @transform_9, window_bounds = array<i64: 2, 2>}]} {
    %c0 = arith.constant 0 : index
    %c0_0 = arith.constant 0 : index
    %0 = vector.load %arg2[%c0, %c0_0] : memref<56x1xf32, #tpu.memory_space<vmem>>, vector<56x1xf32>
    %c0_1 = arith.constant 0 : index
    %c0_2 = arith.constant 0 : index
    %c0_3 = arith.constant 0 : index
    %1 = vector.load %arg1[%c0_1, %c0_2, %c0_3] : memref<9x56x1xf32, #tpu.memory_space<vmem>>, vector<9x56x1xf32>
    %cst = arith.constant 0.000000e+00 : f32
    %2 = vector.broadcast %cst : f32 to vector<56x32xf32>
    %cst_4 = arith.constant 0.000000e+00 : f32
    %3 = vector.broadcast %cst_4 : f32 to vector<12x1xf32>
    %4 = vector.extract_strided_slice %0 {offsets = [0, 0], sizes = [44, 1], strides = [1, 1]} : vector<56x1xf32> to vector<44x1xf32>
    %5 = tpu.concatenate %3, %4 in 0 : vector<12x1xf32>, vector<44x1xf32> -> vector<56x1xf32>
    %6 = vector.extract_strided_slice %1 {offsets = [0, 0, 0], sizes = [1, 56, 1], strides = [1, 1, 1]} : vector<9x56x1xf32> to vector<1x56x1xf32>
    %7 = vector.shape_cast %6 : vector<1x56x1xf32> to vector<56x1xf32>
    %8 = arith.mulf %5, %7 : vector<56x1xf32>
    %c0_5 = arith.constant 0 : index
    %c0_6 = arith.constant 0 : index
    %c0_7 = arith.constant 0 : index
    %9 = vector.load %arg3[%c0_5, %c0_6, %c0_7] : memref<9x1x32xf32, #tpu.memory_space<vmem>>, vector<1x1x32xf32>
    %10 = vector.shape_cast %9 : vector<1x1x32xf32> to vector<1x32xf32>
    %11 = vector.broadcast %8 : vector<56x1xf32> to vector<56x32xf32>
    %12 = vector.broadcast %10 : vector<1x32xf32> to vector<56x32xf32>
    %13 = arith.mulf %11, %12 : vector<56x32xf32>
    %14 = arith.addf %2, %13 : vector<56x32xf32>
    %cst_8 = arith.constant 0.000000e+00 : f32
    %15 = vector.broadcast %cst_8 : f32 to vector<10x1xf32>
    %16 = vector.extract_strided_slice %0 {offsets = [0, 0], sizes = [46, 1], strides = [1, 1]} : vector<56x1xf32> to vector<46x1xf32>
    %17 = tpu.concatenate %15, %16 in 0 : vector<10x1xf32>, vector<46x1xf32> -> vector<56x1xf32>
    %18 = vector.extract_strided_slice %1 {offsets = [1, 0, 0], sizes = [1, 56, 1], strides = [1, 1, 1]} : vector<9x56x1xf32> to vector<1x56x1xf32>
    %19 = vector.shape_cast %18 : vector<1x56x1xf32> to vector<56x1xf32>
    %20 = arith.mulf %17, %19 : vector<56x1xf32>
    %c1 = arith.constant 1 : index
    %c0_9 = arith.constant 0 : index
    %c0_10 = arith.constant 0 : index
    %21 = vector.load %arg3[%c1, %c0_9, %c0_10] : memref<9x1x32xf32, #tpu.memory_space<vmem>>, vector<1x1x32xf32>
    %22 = vector.shape_cast %21 : vector<1x1x32xf32> to vector<1x32xf32>
    %23 = vector.broadcast %20 : vector<56x1xf32> to vector<56x32xf32>
    %24 = vector.broadcast %22 : vector<1x32xf32> to vector<56x32xf32>
    %25 = arith.mulf %23, %24 : vector<56x32xf32>
    %26 = arith.addf %14, %25 : vector<56x32xf32>
    %cst_11 = arith.constant 0.000000e+00 : f32
    %27 = vector.broadcast %cst_11 : f32 to vector<8x1xf32>
    %28 = vector.extract_strided_slice %0 {offsets = [0, 0], sizes = [48, 1], strides = [1, 1]} : vector<56x1xf32> to vector<48x1xf32>
    %29 = tpu.concatenate %27, %28 in 0 : vector<8x1xf32>, vector<48x1xf32> -> vector<56x1xf32>
    %30 = vector.extract_strided_slice %1 {offsets = [2, 0, 0], sizes = [1, 56, 1], strides = [1, 1, 1]} : vector<9x56x1xf32> to vector<1x56x1xf32>
    %31 = vector.shape_cast %30 : vector<1x56x1xf32> to vector<56x1xf32>
    %32 = arith.mulf %29, %31 : vector<56x1xf32>
    %c2 = arith.constant 2 : index
    %c0_12 = arith.constant 0 : index
    %c0_13 = arith.constant 0 : index
    %33 = vector.load %arg3[%c2, %c0_12, %c0_13] : memref<9x1x32xf32, #tpu.memory_space<vmem>>, vector<1x1x32xf32>
    %34 = vector.shape_cast %33 : vector<1x1x32xf32> to vector<1x32xf32>
    %35 = vector.broadcast %32 : vector<56x1xf32> to vector<56x32xf32>
    %36 = vector.broadcast %34 : vector<1x32xf32> to vector<56x32xf32>
    %37 = arith.mulf %35, %36 : vector<56x32xf32>
    %38 = arith.addf %26, %37 : vector<56x32xf32>
    %cst_14 = arith.constant 0.000000e+00 : f32
    %39 = vector.broadcast %cst_14 : f32 to vector<2x1xf32>
    %40 = vector.extract_strided_slice %0 {offsets = [0, 0], sizes = [54, 1], strides = [1, 1]} : vector<56x1xf32> to vector<54x1xf32>
    %41 = tpu.concatenate %39, %40 in 0 : vector<2x1xf32>, vector<54x1xf32> -> vector<56x1xf32>
    %42 = vector.extract_strided_slice %1 {offsets = [3, 0, 0], sizes = [1, 56, 1], strides = [1, 1, 1]} : vector<9x56x1xf32> to vector<1x56x1xf32>
    %43 = vector.shape_cast %42 : vector<1x56x1xf32> to vector<56x1xf32>
    %44 = arith.mulf %41, %43 : vector<56x1xf32>
    %c3 = arith.constant 3 : index
    %c0_15 = arith.constant 0 : index
    %c0_16 = arith.constant 0 : index
    %45 = vector.load %arg3[%c3, %c0_15, %c0_16] : memref<9x1x32xf32, #tpu.memory_space<vmem>>, vector<1x1x32xf32>
    %46 = vector.shape_cast %45 : vector<1x1x32xf32> to vector<1x32xf32>
    %47 = vector.broadcast %44 : vector<56x1xf32> to vector<56x32xf32>
    %48 = vector.broadcast %46 : vector<1x32xf32> to vector<56x32xf32>
    %49 = arith.mulf %47, %48 : vector<56x32xf32>
    %50 = arith.addf %38, %49 : vector<56x32xf32>
    %51 = vector.extract_strided_slice %1 {offsets = [4, 0, 0], sizes = [1, 56, 1], strides = [1, 1, 1]} : vector<9x56x1xf32> to vector<1x56x1xf32>
    %52 = vector.shape_cast %51 : vector<1x56x1xf32> to vector<56x1xf32>
    %53 = arith.mulf %0, %52 : vector<56x1xf32>
    %c4 = arith.constant 4 : index
    %c0_17 = arith.constant 0 : index
    %c0_18 = arith.constant 0 : index
    %54 = vector.load %arg3[%c4, %c0_17, %c0_18] : memref<9x1x32xf32, #tpu.memory_space<vmem>>, vector<1x1x32xf32>
    %55 = vector.shape_cast %54 : vector<1x1x32xf32> to vector<1x32xf32>
    %56 = vector.broadcast %53 : vector<56x1xf32> to vector<56x32xf32>
    %57 = vector.broadcast %55 : vector<1x32xf32> to vector<56x32xf32>
    %58 = arith.mulf %56, %57 : vector<56x32xf32>
    %59 = arith.addf %50, %58 : vector<56x32xf32>
    %cst_19 = arith.constant 0.000000e+00 : f32
    %60 = vector.broadcast %cst_19 : f32 to vector<2x1xf32>
    %61 = vector.extract_strided_slice %0 {offsets = [2, 0], sizes = [54, 1], strides = [1, 1]} : vector<56x1xf32> to vector<54x1xf32>
    %62 = tpu.concatenate %61, %60 in 0 : vector<54x1xf32>, vector<2x1xf32> -> vector<56x1xf32>
    %63 = vector.extract_strided_slice %1 {offsets = [5, 0, 0], sizes = [1, 56, 1], strides = [1, 1, 1]} : vector<9x56x1xf32> to vector<1x56x1xf32>
    %64 = vector.shape_cast %63 : vector<1x56x1xf32> to vector<56x1xf32>
    %65 = arith.mulf %62, %64 : vector<56x1xf32>
    %c5 = arith.constant 5 : index
    %c0_20 = arith.constant 0 : index
    %c0_21 = arith.constant 0 : index
    %66 = vector.load %arg3[%c5, %c0_20, %c0_21] : memref<9x1x32xf32, #tpu.memory_space<vmem>>, vector<1x1x32xf32>
    %67 = vector.shape_cast %66 : vector<1x1x32xf32> to vector<1x32xf32>
    %68 = vector.broadcast %65 : vector<56x1xf32> to vector<56x32xf32>
    %69 = vector.broadcast %67 : vector<1x32xf32> to vector<56x32xf32>
    %70 = arith.mulf %68, %69 : vector<56x32xf32>
    %71 = arith.addf %59, %70 : vector<56x32xf32>
    %cst_22 = arith.constant 0.000000e+00 : f32
    %72 = vector.broadcast %cst_22 : f32 to vector<8x1xf32>
    %73 = vector.extract_strided_slice %0 {offsets = [8, 0], sizes = [48, 1], strides = [1, 1]} : vector<56x1xf32> to vector<48x1xf32>
    %74 = tpu.concatenate %73, %72 in 0 : vector<48x1xf32>, vector<8x1xf32> -> vector<56x1xf32>
    %75 = vector.extract_strided_slice %1 {offsets = [6, 0, 0], sizes = [1, 56, 1], strides = [1, 1, 1]} : vector<9x56x1xf32> to vector<1x56x1xf32>
    %76 = vector.shape_cast %75 : vector<1x56x1xf32> to vector<56x1xf32>
    %77 = arith.mulf %74, %76 : vector<56x1xf32>
    %c6 = arith.constant 6 : index
    %c0_23 = arith.constant 0 : index
    %c0_24 = arith.constant 0 : index
    %78 = vector.load %arg3[%c6, %c0_23, %c0_24] : memref<9x1x32xf32, #tpu.memory_space<vmem>>, vector<1x1x32xf32>
    %79 = vector.shape_cast %78 : vector<1x1x32xf32> to vector<1x32xf32>
    %80 = vector.broadcast %77 : vector<56x1xf32> to vector<56x32xf32>
    %81 = vector.broadcast %79 : vector<1x32xf32> to vector<56x32xf32>
    %82 = arith.mulf %80, %81 : vector<56x32xf32>
    %83 = arith.addf %71, %82 : vector<56x32xf32>
    %cst_25 = arith.constant 0.000000e+00 : f32
    %84 = vector.broadcast %cst_25 : f32 to vector<10x1xf32>
    %85 = vector.extract_strided_slice %0 {offsets = [10, 0], sizes = [46, 1], strides = [1, 1]} : vector<56x1xf32> to vector<46x1xf32>
    %86 = tpu.concatenate %85, %84 in 0 : vector<46x1xf32>, vector<10x1xf32> -> vector<56x1xf32>
    %87 = vector.extract_strided_slice %1 {offsets = [7, 0, 0], sizes = [1, 56, 1], strides = [1, 1, 1]} : vector<9x56x1xf32> to vector<1x56x1xf32>
    %88 = vector.shape_cast %87 : vector<1x56x1xf32> to vector<56x1xf32>
    %89 = arith.mulf %86, %88 : vector<56x1xf32>
    %c7 = arith.constant 7 : index
    %c0_26 = arith.constant 0 : index
    %c0_27 = arith.constant 0 : index
    %90 = vector.load %arg3[%c7, %c0_26, %c0_27] : memref<9x1x32xf32, #tpu.memory_space<vmem>>, vector<1x1x32xf32>
    %91 = vector.shape_cast %90 : vector<1x1x32xf32> to vector<1x32xf32>
    %92 = vector.broadcast %89 : vector<56x1xf32> to vector<56x32xf32>
    %93 = vector.broadcast %91 : vector<1x32xf32> to vector<56x32xf32>
    %94 = arith.mulf %92, %93 : vector<56x32xf32>
    %95 = arith.addf %83, %94 : vector<56x32xf32>
    %cst_28 = arith.constant 0.000000e+00 : f32
    %96 = vector.broadcast %cst_28 : f32 to vector<12x1xf32>
    %97 = vector.extract_strided_slice %0 {offsets = [12, 0], sizes = [44, 1], strides = [1, 1]} : vector<56x1xf32> to vector<44x1xf32>
    %98 = tpu.concatenate %97, %96 in 0 : vector<44x1xf32>, vector<12x1xf32> -> vector<56x1xf32>
    %99 = vector.extract_strided_slice %1 {offsets = [8, 0, 0], sizes = [1, 56, 1], strides = [1, 1, 1]} : vector<9x56x1xf32> to vector<1x56x1xf32>
    %100 = vector.shape_cast %99 : vector<1x56x1xf32> to vector<56x1xf32>
    %101 = arith.mulf %98, %100 : vector<56x1xf32>
    %c8 = arith.constant 8 : index
    %c0_29 = arith.constant 0 : index
    %c0_30 = arith.constant 0 : index
    %102 = vector.load %arg3[%c8, %c0_29, %c0_30] : memref<9x1x32xf32, #tpu.memory_space<vmem>>, vector<1x1x32xf32>
    %103 = vector.shape_cast %102 : vector<1x1x32xf32> to vector<1x32xf32>
    %104 = vector.broadcast %101 : vector<56x1xf32> to vector<56x32xf32>
    %105 = vector.broadcast %103 : vector<1x32xf32> to vector<56x32xf32>
    %106 = arith.mulf %104, %105 : vector<56x32xf32>
    %107 = arith.addf %95, %106 : vector<56x32xf32>
    %c0_31 = arith.constant 0 : index
    %c0_32 = arith.constant 0 : index
    %108 = vector.load %arg4[%c0_31, %c0_32] : memref<1x32xf32, #tpu.memory_space<vmem>>, vector<1x32xf32>
    %109 = vector.broadcast %108 : vector<1x32xf32> to vector<56x32xf32>
    %110 = arith.addf %107, %109 : vector<56x32xf32>
    %cst_33 = arith.constant 0.000000e+00 : f32
    %111 = vector.broadcast %cst_33 : f32 to vector<56x32xf32>
    %112 = arith.maximumf %110, %111 : vector<56x32xf32>
    %cst_34 = arith.constant 0.000000e+00 : f32
    %113 = vector.broadcast %cst_34 : f32 to vector<56x16xf32>
    %cst_35 = arith.constant 0.000000e+00 : f32
    %114 = vector.broadcast %cst_35 : f32 to vector<12x32xf32>
    %115 = vector.extract_strided_slice %112 {offsets = [0, 0], sizes = [44, 32], strides = [1, 1]} : vector<56x32xf32> to vector<44x32xf32>
    %116 = tpu.concatenate %114, %115 in 0 : vector<12x32xf32>, vector<44x32xf32> -> vector<56x32xf32>
    %117 = vector.extract_strided_slice %1 {offsets = [0, 0, 0], sizes = [1, 56, 1], strides = [1, 1, 1]} : vector<9x56x1xf32> to vector<1x56x1xf32>
    %118 = vector.shape_cast %117 : vector<1x56x1xf32> to vector<56x1xf32>
    %119 = vector.broadcast %118 : vector<56x1xf32> to vector<56x32xf32>
    %120 = arith.mulf %116, %119 : vector<56x32xf32>
    %c0_36 = arith.constant 0 : index
    %c0_37 = arith.constant 0 : index
    %c0_38 = arith.constant 0 : index
    %121 = vector.load %arg5[%c0_36, %c0_37, %c0_38] : memref<9x32x16xf32, #tpu.memory_space<vmem>>, vector<1x32x16xf32>
    %122 = vector.shape_cast %121 : vector<1x32x16xf32> to vector<32x16xf32>
    %cst_39 = arith.constant dense<0.000000e+00> : vector<56x16xf32>
    %123 = tpu.matmul %120, %122, %cst_39 {dimension_numbers = #tpu.dot_dimension_numbers<[1], [0], [0], [1], [0, 0, 1, 1], [], []>} : vector<56x32xf32>, vector<32x16xf32>, vector<56x16xf32> -> vector<56x16xf32>
    %124 = arith.addf %113, %123 : vector<56x16xf32>
    %cst_40 = arith.constant 0.000000e+00 : f32
    %125 = vector.broadcast %cst_40 : f32 to vector<10x32xf32>
    %126 = vector.extract_strided_slice %112 {offsets = [0, 0], sizes = [46, 32], strides = [1, 1]} : vector<56x32xf32> to vector<46x32xf32>
    %127 = tpu.concatenate %125, %126 in 0 : vector<10x32xf32>, vector<46x32xf32> -> vector<56x32xf32>
    %128 = vector.extract_strided_slice %1 {offsets = [1, 0, 0], sizes = [1, 56, 1], strides = [1, 1, 1]} : vector<9x56x1xf32> to vector<1x56x1xf32>
    %129 = vector.shape_cast %128 : vector<1x56x1xf32> to vector<56x1xf32>
    %130 = vector.broadcast %129 : vector<56x1xf32> to vector<56x32xf32>
    %131 = arith.mulf %127, %130 : vector<56x32xf32>
    %c1_41 = arith.constant 1 : index
    %c0_42 = arith.constant 0 : index
    %c0_43 = arith.constant 0 : index
    %132 = vector.load %arg5[%c1_41, %c0_42, %c0_43] : memref<9x32x16xf32, #tpu.memory_space<vmem>>, vector<1x32x16xf32>
    %133 = vector.shape_cast %132 : vector<1x32x16xf32> to vector<32x16xf32>
    %cst_44 = arith.constant dense<0.000000e+00> : vector<56x16xf32>
    %134 = tpu.matmul %131, %133, %cst_44 {dimension_numbers = #tpu.dot_dimension_numbers<[1], [0], [0], [1], [0, 0, 1, 1], [], []>} : vector<56x32xf32>, vector<32x16xf32>, vector<56x16xf32> -> vector<56x16xf32>
    %135 = arith.addf %124, %134 : vector<56x16xf32>
    %cst_45 = arith.constant 0.000000e+00 : f32
    %136 = vector.broadcast %cst_45 : f32 to vector<8x32xf32>
    %137 = vector.extract_strided_slice %112 {offsets = [0, 0], sizes = [48, 32], strides = [1, 1]} : vector<56x32xf32> to vector<48x32xf32>
    %138 = tpu.concatenate %136, %137 in 0 : vector<8x32xf32>, vector<48x32xf32> -> vector<56x32xf32>
    %139 = vector.extract_strided_slice %1 {offsets = [2, 0, 0], sizes = [1, 56, 1], strides = [1, 1, 1]} : vector<9x56x1xf32> to vector<1x56x1xf32>
    %140 = vector.shape_cast %139 : vector<1x56x1xf32> to vector<56x1xf32>
    %141 = vector.broadcast %140 : vector<56x1xf32> to vector<56x32xf32>
    %142 = arith.mulf %138, %141 : vector<56x32xf32>
    %c2_46 = arith.constant 2 : index
    %c0_47 = arith.constant 0 : index
    %c0_48 = arith.constant 0 : index
    %143 = vector.load %arg5[%c2_46, %c0_47, %c0_48] : memref<9x32x16xf32, #tpu.memory_space<vmem>>, vector<1x32x16xf32>
    %144 = vector.shape_cast %143 : vector<1x32x16xf32> to vector<32x16xf32>
    %cst_49 = arith.constant dense<0.000000e+00> : vector<56x16xf32>
    %145 = tpu.matmul %142, %144, %cst_49 {dimension_numbers = #tpu.dot_dimension_numbers<[1], [0], [0], [1], [0, 0, 1, 1], [], []>} : vector<56x32xf32>, vector<32x16xf32>, vector<56x16xf32> -> vector<56x16xf32>
    %146 = arith.addf %135, %145 : vector<56x16xf32>
    %cst_50 = arith.constant 0.000000e+00 : f32
    %147 = vector.broadcast %cst_50 : f32 to vector<2x32xf32>
    %148 = vector.extract_strided_slice %112 {offsets = [0, 0], sizes = [54, 32], strides = [1, 1]} : vector<56x32xf32> to vector<54x32xf32>
    %149 = tpu.concatenate %147, %148 in 0 : vector<2x32xf32>, vector<54x32xf32> -> vector<56x32xf32>
    %150 = vector.extract_strided_slice %1 {offsets = [3, 0, 0], sizes = [1, 56, 1], strides = [1, 1, 1]} : vector<9x56x1xf32> to vector<1x56x1xf32>
    %151 = vector.shape_cast %150 : vector<1x56x1xf32> to vector<56x1xf32>
    %152 = vector.broadcast %151 : vector<56x1xf32> to vector<56x32xf32>
    %153 = arith.mulf %149, %152 : vector<56x32xf32>
    %c3_51 = arith.constant 3 : index
    %c0_52 = arith.constant 0 : index
    %c0_53 = arith.constant 0 : index
    %154 = vector.load %arg5[%c3_51, %c0_52, %c0_53] : memref<9x32x16xf32, #tpu.memory_space<vmem>>, vector<1x32x16xf32>
    %155 = vector.shape_cast %154 : vector<1x32x16xf32> to vector<32x16xf32>
    %cst_54 = arith.constant dense<0.000000e+00> : vector<56x16xf32>
    %156 = tpu.matmul %153, %155, %cst_54 {dimension_numbers = #tpu.dot_dimension_numbers<[1], [0], [0], [1], [0, 0, 1, 1], [], []>} : vector<56x32xf32>, vector<32x16xf32>, vector<56x16xf32> -> vector<56x16xf32>
    %157 = arith.addf %146, %156 : vector<56x16xf32>
    %158 = vector.extract_strided_slice %1 {offsets = [4, 0, 0], sizes = [1, 56, 1], strides = [1, 1, 1]} : vector<9x56x1xf32> to vector<1x56x1xf32>
    %159 = vector.shape_cast %158 : vector<1x56x1xf32> to vector<56x1xf32>
    %160 = vector.broadcast %159 : vector<56x1xf32> to vector<56x32xf32>
    %161 = arith.mulf %112, %160 : vector<56x32xf32>
    %c4_55 = arith.constant 4 : index
    %c0_56 = arith.constant 0 : index
    %c0_57 = arith.constant 0 : index
    %162 = vector.load %arg5[%c4_55, %c0_56, %c0_57] : memref<9x32x16xf32, #tpu.memory_space<vmem>>, vector<1x32x16xf32>
    %163 = vector.shape_cast %162 : vector<1x32x16xf32> to vector<32x16xf32>
    %cst_58 = arith.constant dense<0.000000e+00> : vector<56x16xf32>
    %164 = tpu.matmul %161, %163, %cst_58 {dimension_numbers = #tpu.dot_dimension_numbers<[1], [0], [0], [1], [0, 0, 1, 1], [], []>} : vector<56x32xf32>, vector<32x16xf32>, vector<56x16xf32> -> vector<56x16xf32>
    %165 = arith.addf %157, %164 : vector<56x16xf32>
    %cst_59 = arith.constant 0.000000e+00 : f32
    %166 = vector.broadcast %cst_59 : f32 to vector<2x32xf32>
    %167 = vector.extract_strided_slice %112 {offsets = [2, 0], sizes = [54, 32], strides = [1, 1]} : vector<56x32xf32> to vector<54x32xf32>
    %168 = tpu.concatenate %167, %166 in 0 : vector<54x32xf32>, vector<2x32xf32> -> vector<56x32xf32>
    %169 = vector.extract_strided_slice %1 {offsets = [5, 0, 0], sizes = [1, 56, 1], strides = [1, 1, 1]} : vector<9x56x1xf32> to vector<1x56x1xf32>
    %170 = vector.shape_cast %169 : vector<1x56x1xf32> to vector<56x1xf32>
    %171 = vector.broadcast %170 : vector<56x1xf32> to vector<56x32xf32>
    %172 = arith.mulf %168, %171 : vector<56x32xf32>
    %c5_60 = arith.constant 5 : index
    %c0_61 = arith.constant 0 : index
    %c0_62 = arith.constant 0 : index
    %173 = vector.load %arg5[%c5_60, %c0_61, %c0_62] : memref<9x32x16xf32, #tpu.memory_space<vmem>>, vector<1x32x16xf32>
    %174 = vector.shape_cast %173 : vector<1x32x16xf32> to vector<32x16xf32>
    %cst_63 = arith.constant dense<0.000000e+00> : vector<56x16xf32>
    %175 = tpu.matmul %172, %174, %cst_63 {dimension_numbers = #tpu.dot_dimension_numbers<[1], [0], [0], [1], [0, 0, 1, 1], [], []>} : vector<56x32xf32>, vector<32x16xf32>, vector<56x16xf32> -> vector<56x16xf32>
    %176 = arith.addf %165, %175 : vector<56x16xf32>
    %cst_64 = arith.constant 0.000000e+00 : f32
    %177 = vector.broadcast %cst_64 : f32 to vector<8x32xf32>
    %178 = vector.extract_strided_slice %112 {offsets = [8, 0], sizes = [48, 32], strides = [1, 1]} : vector<56x32xf32> to vector<48x32xf32>
    %179 = tpu.concatenate %178, %177 in 0 : vector<48x32xf32>, vector<8x32xf32> -> vector<56x32xf32>
    %180 = vector.extract_strided_slice %1 {offsets = [6, 0, 0], sizes = [1, 56, 1], strides = [1, 1, 1]} : vector<9x56x1xf32> to vector<1x56x1xf32>
    %181 = vector.shape_cast %180 : vector<1x56x1xf32> to vector<56x1xf32>
    %182 = vector.broadcast %181 : vector<56x1xf32> to vector<56x32xf32>
    %183 = arith.mulf %179, %182 : vector<56x32xf32>
    %c6_65 = arith.constant 6 : index
    %c0_66 = arith.constant 0 : index
    %c0_67 = arith.constant 0 : index
    %184 = vector.load %arg5[%c6_65, %c0_66, %c0_67] : memref<9x32x16xf32, #tpu.memory_space<vmem>>, vector<1x32x16xf32>
    %185 = vector.shape_cast %184 : vector<1x32x16xf32> to vector<32x16xf32>
    %cst_68 = arith.constant dense<0.000000e+00> : vector<56x16xf32>
    %186 = tpu.matmul %183, %185, %cst_68 {dimension_numbers = #tpu.dot_dimension_numbers<[1], [0], [0], [1], [0, 0, 1, 1], [], []>} : vector<56x32xf32>, vector<32x16xf32>, vector<56x16xf32> -> vector<56x16xf32>
    %187 = arith.addf %176, %186 : vector<56x16xf32>
    %cst_69 = arith.constant 0.000000e+00 : f32
    %188 = vector.broadcast %cst_69 : f32 to vector<10x32xf32>
    %189 = vector.extract_strided_slice %112 {offsets = [10, 0], sizes = [46, 32], strides = [1, 1]} : vector<56x32xf32> to vector<46x32xf32>
    %190 = tpu.concatenate %189, %188 in 0 : vector<46x32xf32>, vector<10x32xf32> -> vector<56x32xf32>
    %191 = vector.extract_strided_slice %1 {offsets = [7, 0, 0], sizes = [1, 56, 1], strides = [1, 1, 1]} : vector<9x56x1xf32> to vector<1x56x1xf32>
    %192 = vector.shape_cast %191 : vector<1x56x1xf32> to vector<56x1xf32>
    %193 = vector.broadcast %192 : vector<56x1xf32> to vector<56x32xf32>
    %194 = arith.mulf %190, %193 : vector<56x32xf32>
    %c7_70 = arith.constant 7 : index
    %c0_71 = arith.constant 0 : index
    %c0_72 = arith.constant 0 : index
    %195 = vector.load %arg5[%c7_70, %c0_71, %c0_72] : memref<9x32x16xf32, #tpu.memory_space<vmem>>, vector<1x32x16xf32>
    %196 = vector.shape_cast %195 : vector<1x32x16xf32> to vector<32x16xf32>
    %cst_73 = arith.constant dense<0.000000e+00> : vector<56x16xf32>
    %197 = tpu.matmul %194, %196, %cst_73 {dimension_numbers = #tpu.dot_dimension_numbers<[1], [0], [0], [1], [0, 0, 1, 1], [], []>} : vector<56x32xf32>, vector<32x16xf32>, vector<56x16xf32> -> vector<56x16xf32>
    %198 = arith.addf %187, %197 : vector<56x16xf32>
    %cst_74 = arith.constant 0.000000e+00 : f32
    %199 = vector.broadcast %cst_74 : f32 to vector<12x32xf32>
    %200 = vector.extract_strided_slice %112 {offsets = [12, 0], sizes = [44, 32], strides = [1, 1]} : vector<56x32xf32> to vector<44x32xf32>
    %201 = tpu.concatenate %200, %199 in 0 : vector<44x32xf32>, vector<12x32xf32> -> vector<56x32xf32>
    %202 = vector.extract_strided_slice %1 {offsets = [8, 0, 0], sizes = [1, 56, 1], strides = [1, 1, 1]} : vector<9x56x1xf32> to vector<1x56x1xf32>
    %203 = vector.shape_cast %202 : vector<1x56x1xf32> to vector<56x1xf32>
    %204 = vector.broadcast %203 : vector<56x1xf32> to vector<56x32xf32>
    %205 = arith.mulf %201, %204 : vector<56x32xf32>
    %c8_75 = arith.constant 8 : index
    %c0_76 = arith.constant 0 : index
    %c0_77 = arith.constant 0 : index
    %206 = vector.load %arg5[%c8_75, %c0_76, %c0_77] : memref<9x32x16xf32, #tpu.memory_space<vmem>>, vector<1x32x16xf32>
    %207 = vector.shape_cast %206 : vector<1x32x16xf32> to vector<32x16xf32>
    %cst_78 = arith.constant dense<0.000000e+00> : vector<56x16xf32>
    %208 = tpu.matmul %205, %207, %cst_78 {dimension_numbers = #tpu.dot_dimension_numbers<[1], [0], [0], [1], [0, 0, 1, 1], [], []>} : vector<56x32xf32>, vector<32x16xf32>, vector<56x16xf32> -> vector<56x16xf32>
    %209 = arith.addf %198, %208 : vector<56x16xf32>
    %c0_79 = arith.constant 0 : index
    %c0_80 = arith.constant 0 : index
    %210 = vector.load %arg6[%c0_79, %c0_80] : memref<1x16xf32, #tpu.memory_space<vmem>>, vector<1x16xf32>
    %211 = vector.broadcast %210 : vector<1x16xf32> to vector<56x16xf32>
    %212 = arith.addf %209, %211 : vector<56x16xf32>
    %cst_81 = arith.constant 0.000000e+00 : f32
    %213 = vector.broadcast %cst_81 : f32 to vector<56x16xf32>
    %214 = arith.maximumf %212, %213 : vector<56x16xf32>
    %c0_82 = arith.constant 0 : index
    %c0_83 = arith.constant 0 : index
    %c0_84 = arith.constant 0 : index
    %215 = vector.load %arg7[%c0_82, %c0_83, %c0_84] : memref<2x56x16xf32, #tpu.memory_space<vmem>>, vector<1x56x16xf32>
    %216 = vector.shape_cast %215 : vector<1x56x16xf32> to vector<56x16xf32>
    %217 = arith.mulf %214, %216 : vector<56x16xf32>
    %cst_85 = arith.constant dense<0.000000e+00> : vector<56xf32>
    %218 = vector.multi_reduction <add>, %217, %cst_85 [1] : vector<56x16xf32> to vector<56xf32>
    %219 = vector.shape_cast %218 : vector<56xf32> to vector<56x1xf32>
    %c1_86 = arith.constant 1 : index
    %c0_87 = arith.constant 0 : index
    %c0_88 = arith.constant 0 : index
    %220 = vector.load %arg7[%c1_86, %c0_87, %c0_88] : memref<2x56x16xf32, #tpu.memory_space<vmem>>, vector<1x56x16xf32>
    %221 = vector.shape_cast %220 : vector<1x56x16xf32> to vector<56x16xf32>
    %222 = arith.mulf %214, %221 : vector<56x16xf32>
    %cst_89 = arith.constant dense<0.000000e+00> : vector<56xf32>
    %223 = vector.multi_reduction <add>, %222, %cst_89 [1] : vector<56x16xf32> to vector<56xf32>
    %224 = vector.shape_cast %223 : vector<56xf32> to vector<56x1xf32>
    %225 = tpu.concatenate %219, %224 in 1 : vector<56x1xf32>, vector<56x1xf32> -> vector<56x2xf32>
    %c0_90 = arith.constant 0 : index
    %c0_91 = arith.constant 0 : index
    %226 = vector.load %arg9[%c0_90, %c0_91] : memref<2x56xf32, #tpu.memory_space<vmem>>, vector<2x56xf32>
    %cst_92 = arith.constant dense<0.000000e+00> : vector<2x2xf32>
    %227 = tpu.matmul %226, %225, %cst_92 {dimension_numbers = #tpu.dot_dimension_numbers<[1], [0], [0], [1], [0, 0, 1, 1], [], []>} : vector<2x56xf32>, vector<56x2xf32>, vector<2x2xf32> -> vector<2x2xf32>
    %c0_93 = arith.constant 0 : index
    %c0_94 = arith.constant 0 : index
    %228 = vector.load %arg8[%c0_93, %c0_94] : memref<1x2xf32, #tpu.memory_space<vmem>>, vector<1x2xf32>
    %229 = vector.broadcast %228 : vector<1x2xf32> to vector<2x2xf32>
    %230 = arith.addf %227, %229 : vector<2x2xf32>
    %c0_95 = arith.constant 0 : index
    %c0_96 = arith.constant 0 : index
    %231 = vector.load %arg10[%c0_95, %c0_96] : memref<2x2xf32, #tpu.memory_space<vmem>>, vector<2x2xf32>
    tpu.vector_store %arg10[%c0_95, %c0_96], %230 {strides = array<i32>} : memref<2x2xf32, #tpu.memory_space<vmem>>, vector<2x2xf32>,
    return
  }
  func.func @transform_0(%arg0: i32) -> (i32, i32, i32) {
    %c0_i32 = arith.constant 0 : i32
    %c0_i32_0 = arith.constant 0 : i32
    %c0_i32_1 = arith.constant 0 : i32
    %c0_i32_2 = arith.constant 0 : i32
    return %c0_i32, %c0_i32_0, %c0_i32_1 : i32, i32, i32
  }
  func.func @transform_1(%arg0: i32) -> (i32, i32) {
    %c0_i32 = arith.constant 0 : i32
    %c0_i32_0 = arith.constant 0 : i32
    %c0_i32_1 = arith.constant 0 : i32
    return %c0_i32, %c0_i32_0 : i32, i32
  }
  func.func @transform_2(%arg0: i32) -> (i32, i32, i32) {
    %c0_i32 = arith.constant 0 : i32
    %c0_i32_0 = arith.constant 0 : i32
    %c0_i32_1 = arith.constant 0 : i32
    %c0_i32_2 = arith.constant 0 : i32
    return %c0_i32, %c0_i32_0, %c0_i32_1 : i32, i32, i32
  }
  func.func @transform_3(%arg0: i32) -> (i32, i32) {
    %c0_i32 = arith.constant 0 : i32
    %c0_i32_0 = arith.constant 0 : i32
    %c0_i32_1 = arith.constant 0 : i32
    return %c0_i32, %c0_i32_0 : i32, i32
  }
  func.func @transform_4(%arg0: i32) -> (i32, i32, i32) {
    %c0_i32 = arith.constant 0 : i32
    %c0_i32_0 = arith.constant 0 : i32
    %c0_i32_1 = arith.constant 0 : i32
    %c0_i32_2 = arith.constant 0 : i32
    return %c0_i32, %c0_i32_0, %c0_i32_1 : i32, i32, i32
  }
  func.func @transform_5(%arg0: i32) -> (i32, i32) {
    %c0_i32 = arith.constant 0 : i32
    %c0_i32_0 = arith.constant 0 : i32
    %c0_i32_1 = arith.constant 0 : i32
    return %c0_i32, %c0_i32_0 : i32, i32
  }
  func.func @transform_6(%arg0: i32) -> (i32, i32, i32) {
    %c0_i32 = arith.constant 0 : i32
    %c0_i32_0 = arith.constant 0 : i32
    %c0_i32_1 = arith.constant 0 : i32
    %c0_i32_2 = arith.constant 0 : i32
    return %c0_i32, %c0_i32_0, %c0_i32_1 : i32, i32, i32
  }
  func.func @transform_7(%arg0: i32) -> (i32, i32) {
    %c0_i32 = arith.constant 0 : i32
    %c0_i32_0 = arith.constant 0 : i32
    %c0_i32_1 = arith.constant 0 : i32
    return %c0_i32, %c0_i32_0 : i32, i32
  }
  func.func @transform_8(%arg0: i32) -> (i32, i32) {
    %c0_i32 = arith.constant 0 : i32
    %c0_i32_0 = arith.constant 0 : i32
    %c0_i32_1 = arith.constant 0 : i32
    return %c0_i32, %c0_i32_0 : i32, i32
  }
  func.func @transform_9(%arg0: i32) -> (i32, i32) {
    %c0_i32 = arith.constant 0 : i32
    %c0_i32_0 = arith.constant 0 : i32
    %c0_i32_1 = arith.constant 0 : i32
    return %c0_i32, %c0_i32_0 : i32, i32
  }
}

</mosaic_0001>

<llo_original>
// kernel: demosaic_cnn_forward.1
$region0: #{demosaic_cnn_forward.1}
  #allocation0 [shape = 'u32[]', space=smem, size = 0x4, offset = 0x4, fixed_abs, tag = 'smem constant byte address 0x4 - core index']
  #allocation1 [shape = 'u32[72,128]{1,0:T(1,128)}', space=vmem, size = 0x9000, scoped, tag = 'internal scratch']
  %s0 = inlined_call_operand.vmem [shape: f32[9,56,1], index: 0, kind: input, shape index: {}]
  %s1 = inlined_call_operand.vmem [shape: f32[56,1], index: 1, kind: input, shape index: {}]
  %s2 = inlined_call_operand.vmem [shape: f32[9,1,32], index: 2, kind: input, shape index: {}]
  %s3 = inlined_call_operand.vmem [shape: f32[1,32], index: 3, kind: input, shape index: {}]
  %s4 = inlined_call_operand.vmem [shape: f32[9,32,16], index: 4, kind: input, shape index: {}]
  %s5 = inlined_call_operand.vmem [shape: f32[1,16], index: 5, kind: input, shape index: {}]
  %s6 = inlined_call_operand.vmem [shape: f32[2,56,16], index: 6, kind: input, shape index: {}]
  %s7 = inlined_call_operand.vmem [shape: f32[1,2], index: 7, kind: input, shape index: {}]
  %s8 = inlined_call_operand.vmem [shape: f32[2,56], index: 8, kind: input, shape index: {}]
  %s9 = inlined_call_operand.hbm [shape: f32[2,2], index: 9, kind: output, shape index: {}]
  %s10 = sld [smem:[#allocation0]]
  $region46: #{demosaic_cnn_forward.1} parent=0
    _
  %s12 = ssub.s32 1, %s10
  %s13 = scalar_select 0, %s12, %s10
  $region1: #{demosaic_cnn_forward.1} parent=0
    #allocation2 [shape = 'u8[1024]{0}', space=vmem, size = 0x400, scoped, tag = 'output window, operand 0, single buffered']
    #allocation3 [shape = 's32[1]{0}', space=sflag, size = 0x4, scoped, tag = 'scoped memory for demosaic_cnn_forward.1']
    %14 = vsyncpa [#allocation3], 0
    // Predicated region
    $region2: #{demosaic_cnn_forward.1} parent=1 // pred_check
      _
    $region3: #{demosaic_cnn_forward.1} parent=1 // pred_check_branch
      %16 = sbr.rel (0) target = $region5
    $region4: #{demosaic_cnn_forward.1} parent=1 // pred_region
      _
    $region5: #{demosaic_cnn_forward.1} parent=1 // pred_fallthru
      _
    // Predicated region
    $region6: #{demosaic_cnn_forward.1} parent=1 // pred_check
      _
    $region7: #{demosaic_cnn_forward.1} parent=1 // pred_check_branch
      %18 = sbr.rel (0) target = $region9
    $region8: #{demosaic_cnn_forward.1} parent=1 // pred_region
      _
    $region9: #{demosaic_cnn_forward.1} parent=1 // pred_fallthru
      _
    // Predicated region
    $region10: #{demosaic_cnn_forward.1} parent=1 // pred_check
      _
    $region11: #{demosaic_cnn_forward.1} parent=1 // pred_check_branch
      %20 = sbr.rel (0) target = $region13
    $region12: #{demosaic_cnn_forward.1} parent=1 // pred_region
      _
    $region13: #{demosaic_cnn_forward.1} parent=1 // pred_fallthru
      _
    // Predicated region
    $region14: #{demosaic_cnn_forward.1} parent=1 // pred_check
      _
    $region15: #{demosaic_cnn_forward.1} parent=1 // pred_check_branch
      %22 = sbr.rel (0) target = $region17
    $region16: #{demosaic_cnn_forward.1} parent=1 // pred_region
      _
    $region17: #{demosaic_cnn_forward.1} parent=1 // pred_fallthru
      _
    // Predicated region
    $region18: #{demosaic_cnn_forward.1} parent=1 // pred_check
      _
    $region19: #{demosaic_cnn_forward.1} parent=1 // pred_check_branch
      %24 = sbr.rel (0) target = $region21
    $region20: #{demosaic_cnn_forward.1} parent=1 // pred_region
      _
    $region21: #{demosaic_cnn_forward.1} parent=1 // pred_fallthru
      _
    // Predicated region
    $region22: #{demosaic_cnn_forward.1} parent=1 // pred_check
      _
    $region23: #{demosaic_cnn_forward.1} parent=1 // pred_check_branch
      %26 = sbr.rel (0) target = $region25
    $region24: #{demosaic_cnn_forward.1} parent=1 // pred_region
      _
    $region25: #{demosaic_cnn_forward.1} parent=1 // pred_fallthru
      _
    // Predicated region
    $region26: #{demosaic_cnn_forward.1} parent=1 // pred_check
      _
    $region27: #{demosaic_cnn_forward.1} parent=1 // pred_check_branch
      %28 = sbr.rel (0) target = $region29
    $region28: #{demosaic_cnn_forward.1} parent=1 // pred_region
      _
    $region29: #{demosaic_cnn_forward.1} parent=1 // pred_fallthru
      _
    // Predicated region
    $region30: #{demosaic_cnn_forward.1} parent=1 // pred_check
      _
    $region31: #{demosaic_cnn_forward.1} parent=1 // pred_check_branch
      %30 = sbr.rel (0) target = $region33
    $region32: #{demosaic_cnn_forward.1} parent=1 // pred_region
      _
    $region33: #{demosaic_cnn_forward.1} parent=1 // pred_fallthru
      _
    // Predicated region
    $region34: #{demosaic_cnn_forward.1} parent=1 // pred_check
      _
    $region35: #{demosaic_cnn_forward.1} parent=1 // pred_check_branch
      %32 = sbr.rel (0) target = $region37
    $region36: #{demosaic_cnn_forward.1} parent=1 // pred_region
      _
    $region37: #{demosaic_cnn_forward.1} parent=1 // pred_fallthru
      _
    %v33 = vld [vmem:[%s1] sm:$0xff]
    %v34 = vld [vmem:[%s1 + $0x8] sm:$0xff]
    %v35 = vld [vmem:[%s1 + $0x10] sm:$0xff]
    %v36 = vld [vmem:[%s1 + $0x18] sm:$0xff]
    %v37 = vld [vmem:[%s1 + $0x20] sm:$0xff]
    %v38 = vld [vmem:[%s1 + $0x28] sm:$0xff]
    %v39 = vld [vmem:[%s1 + $0x30] sm:$0xff]
    %v40 = vld [vmem:[%s0] sm:$0xff]
    %v41 = vld [vmem:[%s0 + $0x8] sm:$0xff]
    %v42 = vld [vmem:[%s0 + $0x10] sm:$0xff]
    %v43 = vld [vmem:[%s0 + $0x18] sm:$0xff]
    %v44 = vld [vmem:[%s0 + $0x20] sm:$0xff]
    %v45 = vld [vmem:[%s0 + $0x28] sm:$0xff]
    %v46 = vld [vmem:[%s0 + $0x30] sm:$0xff]
    %v47 = vld [vmem:[%s0 + $0x38] sm:$0xff]
    %v48 = vld [vmem:[%s0 + $0x40] sm:$0xff]
    %v49 = vld [vmem:[%s0 + $0x48] sm:$0xff]
    %v50 = vld [vmem:[%s0 + $0x50] sm:$0xff]
    %v51 = vld [vmem:[%s0 + $0x58] sm:$0xff]
    %v52 = vld [vmem:[%s0 + $0x60] sm:$0xff]
    %v53 = vld [vmem:[%s0 + $0x68] sm:$0xff]
    %v54 = vld [vmem:[%s0 + $0x70] sm:$0xff]
    %v55 = vld [vmem:[%s0 + $0x78] sm:$0xff]
    %v56 = vld [vmem:[%s0 + $0x80] sm:$0xff]
    %v57 = vld [vmem:[%s0 + $0x88] sm:$0xff]
    %v58 = vld [vmem:[%s0 + $0x90] sm:$0xff]
    %v59 = vld [vmem:[%s0 + $0x98] sm:$0xff]
    %v60 = vld [vmem:[%s0 + $0xa0] sm:$0xff]
    %v61 = vld [vmem:[%s0 + $0xa8] sm:$0xff]
    %v62 = vld [vmem:[%s0 + $0xb0] sm:$0xff]
    %v63 = vld [vmem:[%s0 + $0xb8] sm:$0xff]
    %v64 = vld [vmem:[%s0 + $0xc0] sm:$0xff]
    %v65 = vld [vmem:[%s0 + $0xc8] sm:$0xff]
    %v66 = vld [vmem:[%s0 + $0xd0] sm:$0xff]
    %v67 = vld [vmem:[%s0 + $0xd8] sm:$0xff]
    %v68 = vld [vmem:[%s0 + $0xe0] sm:$0xff]
    %v69 = vld [vmem:[%s0 + $0xe8] sm:$0xff]
    %v70 = vld [vmem:[%s0 + $0xf0] sm:$0xff]
    %v71 = vld [vmem:[%s0 + $0xf8] sm:$0xff]
    %v72 = vld [vmem:[%s0 + $0x100] sm:$0xff]
    %v73 = vld [vmem:[%s0 + $0x108] sm:$0xff]
    %v74 = vld [vmem:[%s0 + $0x110] sm:$0xff]
    %v75 = vld [vmem:[%s0 + $0x118] sm:$0xff]
    %v76 = vld [vmem:[%s0 + $0x120] sm:$0xff]
    %v77 = vld [vmem:[%s0 + $0x128] sm:$0xff]
    %v78 = vld [vmem:[%s0 + $0x130] sm:$0xff]
    %v79 = vld [vmem:[%s0 + $0x138] sm:$0xff]
    %v80 = vld [vmem:[%s0 + $0x140] sm:$0xff]
    %v81 = vld [vmem:[%s0 + $0x148] sm:$0xff]
    %v82 = vld [vmem:[%s0 + $0x150] sm:$0xff]
    %v83 = vld [vmem:[%s0 + $0x158] sm:$0xff]
    %v84 = vld [vmem:[%s0 + $0x160] sm:$0xff]
    %v85 = vld [vmem:[%s0 + $0x168] sm:$0xff]
    %v86 = vld [vmem:[%s0 + $0x170] sm:$0xff]
    %v87 = vld [vmem:[%s0 + $0x178] sm:$0xff]
    %v88 = vld [vmem:[%s0 + $0x180] sm:$0xff]
    %v89 = vld [vmem:[%s0 + $0x188] sm:$0xff]
    %v90 = vld [vmem:[%s0 + $0x190] sm:$0xff]
    %v91 = vld [vmem:[%s0 + $0x198] sm:$0xff]
    %v92 = vld [vmem:[%s0 + $0x1a0] sm:$0xff]
    %v93 = vld [vmem:[%s0 + $0x1a8] sm:$0xff]
    %v94 = vld [vmem:[%s0 + $0x1b0] sm:$0xff]
    %v95 = vld [vmem:[%s0 + $0x1b8] sm:$0xff]
    %v96 = vld [vmem:[%s0 + $0x1c0] sm:$0xff]
    %v97 = vld [vmem:[%s0 + $0x1c8] sm:$0xff]
    %v98 = vld [vmem:[%s0 + $0x1d0] sm:$0xff]
    %v99 = vld [vmem:[%s0 + $0x1d8] sm:$0xff]
    %v100 = vld [vmem:[%s0 + $0x1e0] sm:$0xff]
    %v101 = vld [vmem:[%s0 + $0x1e8] sm:$0xff]
    %v102 = vld [vmem:[%s0 + $0x1f0] sm:$0xff]
    %vm109 = vcmask 1043456
    %v110 = vrot.slane %v33, 4
    %v111 = vrot.slane %v34, 4
    %v112 = vsel %vm109, %v110, %v111
    %v113 = vrot.slane %v35, 4
    %v114 = vsel %vm109, %v111, %v113
    %v115 = vrot.slane %v36, 4
    %v116 = vsel %vm109, %v113, %v115
    %v117 = vrot.slane %v37, 4
    %v118 = vsel %vm109, %v115, %v117
    %v119 = vrot.slane %v38, 4
    %v120 = vsel %vm109, %v117, %v119
    %v127 = vsel %vm109, 0.0, %v110
    %v128 = vmul.f32 %v40, 0.0
    %v129 = vmul.f32 %v127, %v41
    %v130 = vmul.f32 %v112, %v42
    %v131 = vmul.f32 %v114, %v43
    %v132 = vmul.f32 %v116, %v44
    %v133 = vmul.f32 %v118, %v45
    %v134 = vmul.f32 %v120, %v46
    %v135 = vld [vmem:[%s2] sm:$0x1]
    %137 = vset.pattern.permute.xlu0 0
    %138 = vperm.xlu0 %137, %v128
    %v139 = vpop.permute.xlu0 %138
    %142 = vset.pattern.permute.xlu0 0
    %143 = vperm.xlu0 %142, %v129
    %v144 = vpop.permute.xlu0 %143
    %147 = vset.pattern.permute.xlu0 0
    %148 = vperm.xlu0 %147, %v130
    %v149 = vpop.permute.xlu0 %148
    %152 = vset.pattern.permute.xlu0 0
    %153 = vperm.xlu0 %152, %v131
    %v154 = vpop.permute.xlu0 %153
    %157 = vset.pattern.permute.xlu0 0
    %158 = vperm.xlu0 %157, %v132
    %v159 = vpop.permute.xlu0 %158
    %162 = vset.pattern.permute.xlu0 0
    %163 = vperm.xlu0 %162, %v133
    %v164 = vpop.permute.xlu0 %163
    %167 = vset.pattern.permute.xlu0 0
    %168 = vperm.xlu0 %167, %v134
    %v169 = vpop.permute.xlu0 %168
    %v172 = vperm.slane %v135, 0
    %v174 = vmul.f32 %v139, %v172
    %v175 = vmul.f32 %v144, %v172
    %v176 = vmul.f32 %v149, %v172
    %v177 = vmul.f32 %v154, %v172
    %v178 = vmul.f32 %v159, %v172
    %v179 = vmul.f32 %v164, %v172
    %v180 = vmul.f32 %v169, %v172
    %v181 = vadd.f32 %v174, 0.0
    %v182 = vadd.f32 %v175, 0.0
    %v183 = vadd.f32 %v176, 0.0
    %v184 = vadd.f32 %v177, 0.0
    %v185 = vadd.f32 %v178, 0.0
    %v186 = vadd.f32 %v179, 0.0
    %v187 = vadd.f32 %v180, 0.0
    %vm188 = vcmask 1041408
    %v189 = vrot.slane %v33, 6
    %v190 = vrot.slane %v34, 6
    %v191 = vsel %vm188, %v189, %v190
    %v192 = vrot.slane %v35, 6
    %v193 = vsel %vm188, %v190, %v192
    %v194 = vrot.slane %v36, 6
    %v195 = vsel %vm188, %v192, %v194
    %v196 = vrot.slane %v37, 6
    %v197 = vsel %vm188, %v194, %v196
    %v198 = vrot.slane %v38, 6
    %v199 = vsel %vm188, %v196, %v198
    %v206 = vsel %vm188, 0.0, %v189
    %v207 = vmul.f32 %v47, 0.0
    %v208 = vmul.f32 %v206, %v48
    %v209 = vmul.f32 %v191, %v49
    %v210 = vmul.f32 %v193, %v50
    %v211 = vmul.f32 %v195, %v51
    %v212 = vmul.f32 %v197, %v52
    %v213 = vmul.f32 %v199, %v53
    %s214 = scalar_lea.vmem %s2, 1
    %v215 = vld [vmem:[%s214] sm:$0x1]
    %217 = vset.pattern.permute.xlu0 0
    %218 = vperm.xlu0 %217, %v207
    %v219 = vpop.permute.xlu0 %218
    %222 = vset.pattern.permute.xlu0 0
    %223 = vperm.xlu0 %222, %v208
    %v224 = vpop.permute.xlu0 %223
    %227 = vset.pattern.permute.xlu0 0
    %228 = vperm.xlu0 %227, %v209
    %v229 = vpop.permute.xlu0 %228
    %232 = vset.pattern.permute.xlu0 0
    %233 = vperm.xlu0 %232, %v210
    %v234 = vpop.permute.xlu0 %233
    %237 = vset.pattern.permute.xlu0 0
    %238 = vperm.xlu0 %237, %v211
    %v239 = vpop.permute.xlu0 %238
    %242 = vset.pattern.permute.xlu0 0
    %243 = vperm.xlu0 %242, %v212
    %v244 = vpop.permute.xlu0 %243
    %247 = vset.pattern.permute.xlu0 0
    %248 = vperm.xlu0 %247, %v213
    %v249 = vpop.permute.xlu0 %248
    %v252 = vperm.slane %v215, 0
    %v254 = vmul.f32 %v219, %v252
    %v255 = vmul.f32 %v224, %v252
    %v256 = vmul.f32 %v229, %v252
    %v257 = vmul.f32 %v234, %v252
    %v258 = vmul.f32 %v239, %v252
    %v259 = vmul.f32 %v244, %v252
    %v260 = vmul.f32 %v249, %v252
    %v261 = vadd.f32 %v181, %v254
    %v262 = vadd.f32 %v182, %v255
    %v263 = vadd.f32 %v183, %v256
    %v264 = vadd.f32 %v184, %v257
    %v265 = vadd.f32 %v185, %v258
    %v266 = vadd.f32 %v186, %v259
    %v267 = vadd.f32 %v187, %v260
    %v268 = vmul.f32 %v54, 0.0
    %v269 = vmul.f32 %v33, %v55
    %v270 = vmul.f32 %v34, %v56
    %v271 = vmul.f32 %v35, %v57
    %v272 = vmul.f32 %v36, %v58
    %v273 = vmul.f32 %v37, %v59
    %v274 = vmul.f32 %v38, %v60
    %s275 = scalar_lea.vmem %s2, 2
    %v276 = vld [vmem:[%s275] sm:$0x1]
    %278 = vset.pattern.permute.xlu0 0
    %279 = vperm.xlu0 %278, %v268
    %v280 = vpop.permute.xlu0 %279
    %283 = vset.pattern.permute.xlu0 0
    %284 = vperm.xlu0 %283, %v269
    %v285 = vpop.permute.xlu0 %284
    %288 = vset.pattern.permute.xlu0 0
    %289 = vperm.xlu0 %288, %v270
    %v290 = vpop.permute.xlu0 %289
    %293 = vset.pattern.permute.xlu0 0
    %294 = vperm.xlu0 %293, %v271
    %v295 = vpop.permute.xlu0 %294
    %298 = vset.pattern.permute.xlu0 0
    %299 = vperm.xlu0 %298, %v272
    %v300 = vpop.permute.xlu0 %299
    %303 = vset.pattern.permute.xlu0 0
    %304 = vperm.xlu0 %303, %v273
    %v305 = vpop.permute.xlu0 %304
    %308 = vset.pattern.permute.xlu0 0
    %309 = vperm.xlu0 %308, %v274
    %v310 = vpop.permute.xlu0 %309
    %v313 = vperm.slane %v276, 0
    %v315 = vmul.f32 %v280, %v313
    %v316 = vmul.f32 %v285, %v313
    %v317 = vmul.f32 %v290, %v313
    %v318 = vmul.f32 %v295, %v313
    %v319 = vmul.f32 %v300, %v313
    %v320 = vmul.f32 %v305, %v313
    %v321 = vmul.f32 %v310, %v313
    %v322 = vadd.f32 %v261, %v315
    %v323 = vadd.f32 %v262, %v316
    %v324 = vadd.f32 %v263, %v317
    %v325 = vadd.f32 %v264, %v318
    %v326 = vadd.f32 %v265, %v319
    %v327 = vadd.f32 %v266, %v320
    %v328 = vadd.f32 %v267, %v321
    %v330 = vrot.slane %v39, 6
    %v331 = vsel %vm188, %v198, %v330
    %v333 = vmul.f32 %v206, %v61
    %v334 = vmul.f32 %v191, %v62
    %v335 = vmul.f32 %v193, %v63
    %v336 = vmul.f32 %v195, %v64
    %v337 = vmul.f32 %v197, %v65
    %v338 = vmul.f32 %v199, %v66
    %v339 = vmul.f32 %v331, %v67
    %s340 = scalar_lea.vmem %s2, 3
    %v341 = vld [vmem:[%s340] sm:$0x1]
    %343 = vset.pattern.permute.xlu0 0
    %344 = vperm.xlu0 %343, %v333
    %v345 = vpop.permute.xlu0 %344
    %348 = vset.pattern.permute.xlu0 0
    %349 = vperm.xlu0 %348, %v334
    %v350 = vpop.permute.xlu0 %349
    %353 = vset.pattern.permute.xlu0 0
    %354 = vperm.xlu0 %353, %v335
    %v355 = vpop.permute.xlu0 %354
    %358 = vset.pattern.permute.xlu0 0
    %359 = vperm.xlu0 %358, %v336
    %v360 = vpop.permute.xlu0 %359
    %363 = vset.pattern.permute.xlu0 0
    %364 = vperm.xlu0 %363, %v337
    %v365 = vpop.permute.xlu0 %364
    %368 = vset.pattern.permute.xlu0 0
    %369 = vperm.xlu0 %368, %v338
    %v370 = vpop.permute.xlu0 %369
    %373 = vset.pattern.permute.xlu0 0
    %374 = vperm.xlu0 %373, %v339
    %v375 = vpop.permute.xlu0 %374
    %v378 = vperm.slane %v341, 0
    %v380 = vmul.f32 %v345, %v378
    %v381 = vmul.f32 %v350, %v378
    %v382 = vmul.f32 %v355, %v378
    %v383 = vmul.f32 %v360, %v378
    %v384 = vmul.f32 %v365, %v378
    %v385 = vmul.f32 %v370, %v378
    %v386 = vmul.f32 %v375, %v378
    %v387 = vadd.f32 %v322, %v380
    %v388 = vadd.f32 %v323, %v381
    %v389 = vadd.f32 %v324, %v382
    %v390 = vadd.f32 %v325, %v383
    %v391 = vadd.f32 %v326, %v384
    %v392 = vadd.f32 %v327, %v385
    %v393 = vadd.f32 %v328, %v386
    %v394 = vmul.f32 %v33, %v68
    %v395 = vmul.f32 %v34, %v69
    %v396 = vmul.f32 %v35, %v70
    %v397 = vmul.f32 %v36, %v71
    %v398 = vmul.f32 %v37, %v72
    %v399 = vmul.f32 %v38, %v73
    %v400 = vmul.f32 %v39, %v74
    %s401 = scalar_lea.vmem %s2, 4
    %v402 = vld [vmem:[%s401] sm:$0x1]
    %404 = vset.pattern.permute.xlu0 0
    %405 = vperm.xlu0 %404, %v394
    %v406 = vpop.permute.xlu0 %405
    %409 = vset.pattern.permute.xlu0 0
    %410 = vperm.xlu0 %409, %v395
    %v411 = vpop.permute.xlu0 %410
    %414 = vset.pattern.permute.xlu0 0
    %415 = vperm.xlu0 %414, %v396
    %v416 = vpop.permute.xlu0 %415
    %419 = vset.pattern.permute.xlu0 0
    %420 = vperm.xlu0 %419, %v397
    %v421 = vpop.permute.xlu0 %420
    %424 = vset.pattern.permute.xlu0 0
    %425 = vperm.xlu0 %424, %v398
    %v426 = vpop.permute.xlu0 %425
    %429 = vset.pattern.permute.xlu0 0
    %430 = vperm.xlu0 %429, %v399
    %v431 = vpop.permute.xlu0 %430
    %434 = vset.pattern.permute.xlu0 0
    %435 = vperm.xlu0 %434, %v400
    %v436 = vpop.permute.xlu0 %435
    %v439 = vperm.slane %v402, 0
    %v441 = vmul.f32 %v406, %v439
    %v442 = vmul.f32 %v411, %v439
    %v443 = vmul.f32 %v416, %v439
    %v444 = vmul.f32 %v421, %v439
    %v445 = vmul.f32 %v426, %v439
    %v446 = vmul.f32 %v431, %v439
    %v447 = vmul.f32 %v436, %v439
    %v448 = vadd.f32 %v387, %v441
    %v449 = vadd.f32 %v388, %v442
    %v450 = vadd.f32 %v389, %v443
    %v451 = vadd.f32 %v390, %v444
    %v452 = vadd.f32 %v391, %v445
    %v453 = vadd.f32 %v392, %v446
    %v454 = vadd.f32 %v393, %v447
    %vm455 = vcmask 1045504
    %v456 = vrot.slane %v33, 2
    %v457 = vrot.slane %v34, 2
    %v458 = vsel %vm455, %v456, %v457
    %v459 = vrot.slane %v35, 2
    %v460 = vsel %vm455, %v457, %v459
    %v461 = vrot.slane %v36, 2
    %v462 = vsel %vm455, %v459, %v461
    %v463 = vrot.slane %v37, 2
    %v464 = vsel %vm455, %v461, %v463
    %v465 = vrot.slane %v38, 2
    %v466 = vsel %vm455, %v463, %v465
    %v467 = vrot.slane %v39, 2
    %v468 = vsel %vm455, %v465, %v467
    %v476 = vsel %vm455, %v467, 0.0
    %v477 = vmul.f32 %v458, %v75
    %v478 = vmul.f32 %v460, %v76
    %v479 = vmul.f32 %v462, %v77
    %v480 = vmul.f32 %v464, %v78
    %v481 = vmul.f32 %v466, %v79
    %v482 = vmul.f32 %v468, %v80
    %v483 = vmul.f32 %v476, %v81
    %s484 = scalar_lea.vmem %s2, 5
    %v485 = vld [vmem:[%s484] sm:$0x1]
    %487 = vset.pattern.permute.xlu0 0
    %488 = vperm.xlu0 %487, %v477
    %v489 = vpop.permute.xlu0 %488
    %492 = vset.pattern.permute.xlu0 0
    %493 = vperm.xlu0 %492, %v478
    %v494 = vpop.permute.xlu0 %493
    %497 = vset.pattern.permute.xlu0 0
    %498 = vperm.xlu0 %497, %v479
    %v499 = vpop.permute.xlu0 %498
    %502 = vset.pattern.permute.xlu0 0
    %503 = vperm.xlu0 %502, %v480
    %v504 = vpop.permute.xlu0 %503
    %507 = vset.pattern.permute.xlu0 0
    %508 = vperm.xlu0 %507, %v481
    %v509 = vpop.permute.xlu0 %508
    %512 = vset.pattern.permute.xlu0 0
    %513 = vperm.xlu0 %512, %v482
    %v514 = vpop.permute.xlu0 %513
    %517 = vset.pattern.permute.xlu0 0
    %518 = vperm.xlu0 %517, %v483
    %v519 = vpop.permute.xlu0 %518
    %v522 = vperm.slane %v485, 0
    %v524 = vmul.f32 %v489, %v522
    %v525 = vmul.f32 %v494, %v522
    %v526 = vmul.f32 %v499, %v522
    %v527 = vmul.f32 %v504, %v522
    %v528 = vmul.f32 %v509, %v522
    %v529 = vmul.f32 %v514, %v522
    %v530 = vmul.f32 %v519, %v522
    %v531 = vadd.f32 %v448, %v524
    %v532 = vadd.f32 %v449, %v525
    %v533 = vadd.f32 %v450, %v526
    %v534 = vadd.f32 %v451, %v527
    %v535 = vadd.f32 %v452, %v528
    %v536 = vadd.f32 %v453, %v529
    %v537 = vadd.f32 %v454, %v530
    %v538 = vmul.f32 %v34, %v82
    %v539 = vmul.f32 %v35, %v83
    %v540 = vmul.f32 %v36, %v84
    %v541 = vmul.f32 %v37, %v85
    %v542 = vmul.f32 %v38, %v86
    %v543 = vmul.f32 %v39, %v87
    %v544 = vmul.f32 %v88, 0.0
    %s545 = scalar_lea.vmem %s2, 6
    %v546 = vld [vmem:[%s545] sm:$0x1]
    %548 = vset.pattern.permute.xlu0 0
    %549 = vperm.xlu0 %548, %v538
    %v550 = vpop.permute.xlu0 %549
    %553 = vset.pattern.permute.xlu0 0
    %554 = vperm.xlu0 %553, %v539
    %v555 = vpop.permute.xlu0 %554
    %558 = vset.pattern.permute.xlu0 0
    %559 = vperm.xlu0 %558, %v540
    %v560 = vpop.permute.xlu0 %559
    %563 = vset.pattern.permute.xlu0 0
    %564 = vperm.xlu0 %563, %v541
    %v565 = vpop.permute.xlu0 %564
    %568 = vset.pattern.permute.xlu0 0
    %569 = vperm.xlu0 %568, %v542
    %v570 = vpop.permute.xlu0 %569
    %573 = vset.pattern.permute.xlu0 0
    %574 = vperm.xlu0 %573, %v543
    %v575 = vpop.permute.xlu0 %574
    %578 = vset.pattern.permute.xlu0 0
    %579 = vperm.xlu0 %578, %v544
    %v580 = vpop.permute.xlu0 %579
    %v583 = vperm.slane %v546, 0
    %v585 = vmul.f32 %v550, %v583
    %v586 = vmul.f32 %v555, %v583
    %v587 = vmul.f32 %v560, %v583
    %v588 = vmul.f32 %v565, %v583
    %v589 = vmul.f32 %v570, %v583
    %v590 = vmul.f32 %v575, %v583
    %v591 = vmul.f32 %v580, %v583
    %v592 = vadd.f32 %v531, %v585
    %v593 = vadd.f32 %v532, %v586
    %v594 = vadd.f32 %v533, %v587
    %v595 = vadd.f32 %v534, %v588
    %v596 = vadd.f32 %v535, %v589
    %v597 = vadd.f32 %v536, %v590
    %v598 = vadd.f32 %v537, %v591
    %v599 = vmul.f32 %v460, %v89
    %v600 = vmul.f32 %v462, %v90
    %v601 = vmul.f32 %v464, %v91
    %v602 = vmul.f32 %v466, %v92
    %v603 = vmul.f32 %v468, %v93
    %v604 = vmul.f32 %v476, %v94
    %v605 = vmul.f32 %v95, 0.0
    %s606 = scalar_lea.vmem %s2, 7
    %v607 = vld [vmem:[%s606] sm:$0x1]
    %609 = vset.pattern.permute.xlu0 0
    %610 = vperm.xlu0 %609, %v599
    %v611 = vpop.permute.xlu0 %610
    %614 = vset.pattern.permute.xlu0 0
    %615 = vperm.xlu0 %614, %v600
    %v616 = vpop.permute.xlu0 %615
    %619 = vset.pattern.permute.xlu0 0
    %620 = vperm.xlu0 %619, %v601
    %v621 = vpop.permute.xlu0 %620
    %624 = vset.pattern.permute.xlu0 0
    %625 = vperm.xlu0 %624, %v602
    %v626 = vpop.permute.xlu0 %625
    %629 = vset.pattern.permute.xlu0 0
    %630 = vperm.xlu0 %629, %v603
    %v631 = vpop.permute.xlu0 %630
    %634 = vset.pattern.permute.xlu0 0
    %635 = vperm.xlu0 %634, %v604
    %v636 = vpop.permute.xlu0 %635
    %639 = vset.pattern.permute.xlu0 0
    %640 = vperm.xlu0 %639, %v605
    %v641 = vpop.permute.xlu0 %640
    %v644 = vperm.slane %v607, 0
    %v646 = vmul.f32 %v611, %v644
    %v647 = vmul.f32 %v616, %v644
    %v648 = vmul.f32 %v621, %v644
    %v649 = vmul.f32 %v626, %v644
    %v650 = vmul.f32 %v631, %v644
    %v651 = vmul.f32 %v636, %v644
    %v652 = vmul.f32 %v641, %v644
    %v653 = vadd.f32 %v592, %v646
    %v654 = vadd.f32 %v593, %v647
    %v655 = vadd.f32 %v594, %v648
    %v656 = vadd.f32 %v595, %v649
    %v657 = vadd.f32 %v596, %v650
    %v658 = vadd.f32 %v597, %v651
    %v659 = vadd.f32 %v598, %v652
    %v660 = vrot.slane %v39, 4
    %v661 = vsel %vm109, %v119, %v660
    %v664 = vsel %vm109, %v660, 0.0
    %v665 = vmul.f32 %v114, %v96
    %v666 = vmul.f32 %v116, %v97
    %v667 = vmul.f32 %v118, %v98
    %v668 = vmul.f32 %v120, %v99
    %v669 = vmul.f32 %v661, %v100
    %v670 = vmul.f32 %v664, %v101
    %v671 = vmul.f32 %v102, 0.0
    %s672 = scalar_lea.vmem %s2, 8
    %v673 = vld [vmem:[%s672] sm:$0x1]
    %675 = vset.pattern.permute.xlu0 0
    %676 = vperm.xlu0 %675, %v665
    %v677 = vpop.permute.xlu0 %676
    %680 = vset.pattern.permute.xlu0 0
    %681 = vperm.xlu0 %680, %v666
    %v682 = vpop.permute.xlu0 %681
    %685 = vset.pattern.permute.xlu0 0
    %686 = vperm.xlu0 %685, %v667
    %v687 = vpop.permute.xlu0 %686
    %690 = vset.pattern.permute.xlu0 0
    %691 = vperm.xlu0 %690, %v668
    %v692 = vpop.permute.xlu0 %691
    %695 = vset.pattern.permute.xlu0 0
    %696 = vperm.xlu0 %695, %v669
    %v697 = vpop.permute.xlu0 %696
    %700 = vset.pattern.permute.xlu0 0
    %701 = vperm.xlu0 %700, %v670
    %v702 = vpop.permute.xlu0 %701
    %705 = vset.pattern.permute.xlu0 0
    %706 = vperm.xlu0 %705, %v671
    %v707 = vpop.permute.xlu0 %706
    %v710 = vperm.slane %v673, 0
    %v712 = vmul.f32 %v677, %v710
    %v713 = vmul.f32 %v682, %v710
    %v714 = vmul.f32 %v687, %v710
    %v715 = vmul.f32 %v692, %v710
    %v716 = vmul.f32 %v697, %v710
    %v717 = vmul.f32 %v702, %v710
    %v718 = vmul.f32 %v707, %v710
    %v719 = vadd.f32 %v653, %v712
    %v720 = vadd.f32 %v654, %v713
    %v721 = vadd.f32 %v655, %v714
    %v722 = vadd.f32 %v656, %v715
    %v723 = vadd.f32 %v657, %v716
    %v724 = vadd.f32 %v658, %v717
    %v725 = vadd.f32 %v659, %v718
    %v726 = vld [vmem:[%s3] sm:$0x1]
    %v728 = vperm.slane %v726, 0
    %v730 = vadd.f32 %v719, %v728
    %v731 = vadd.f32 %v720, %v728
    %v732 = vadd.f32 %v721, %v728
    %v733 = vadd.f32 %v722, %v728
    %v734 = vadd.f32 %v723, %v728
    %v735 = vadd.f32 %v724, %v728
    %v736 = vadd.f32 %v725, %v728
    %v737 = vmax.f32 %v730, 0.0
    %v738 = vmax.f32 %v731, 0.0
    %v739 = vmax.f32 %v732, 0.0
    %v740 = vmax.f32 %v733, 0.0
    %v741 = vmax.f32 %v734, 0.0
    %v742 = vmax.f32 %v735, 0.0
    %v743 = vmax.f32 %v736, 0.0
    %v750 = vrot.slane %v737, 4
    %v751 = vrot.slane %v738, 4
    %v752 = vsel %vm109, %v750, %v751
    %v753 = vrot.slane %v739, 4
    %v754 = vsel %vm109, %v751, %v753
    %v755 = vrot.slane %v740, 4
    %v756 = vsel %vm109, %v753, %v755
    %v757 = vrot.slane %v741, 4
    %v758 = vsel %vm109, %v755, %v757
    %v759 = vrot.slane %v742, 4
    %v760 = vsel %vm109, %v757, %v759
    %v767 = vsel %vm109, 0.0, %v750
    %769 = vset.pattern.permute.xlu0 0
    %770 = vperm.xlu0 %769, %v40
    %v771 = vpop.permute.xlu0 %770
    %774 = vset.pattern.permute.xlu0 0
    %775 = vperm.xlu0 %774, %v41
    %v776 = vpop.permute.xlu0 %775
    %779 = vset.pattern.permute.xlu0 0
    %780 = vperm.xlu0 %779, %v42
    %v781 = vpop.permute.xlu0 %780
    %784 = vset.pattern.permute.xlu0 0
    %785 = vperm.xlu0 %784, %v43
    %v786 = vpop.permute.xlu0 %785
    %789 = vset.pattern.permute.xlu0 0
    %790 = vperm.xlu0 %789, %v44
    %v791 = vpop.permute.xlu0 %790
    %794 = vset.pattern.permute.xlu0 0
    %795 = vperm.xlu0 %794, %v45
    %v796 = vpop.permute.xlu0 %795
    %799 = vset.pattern.permute.xlu0 0
    %800 = vperm.xlu0 %799, %v46
    %v801 = vpop.permute.xlu0 %800
    %v803 = vmul.f32 %v771, 0.0
    %v804 = vmul.f32 %v767, %v776
    %v805 = vmul.f32 %v752, %v781
    %v806 = vmul.f32 %v754, %v786
    %v807 = vmul.f32 %v756, %v791
    %v808 = vmul.f32 %v758, %v796
    %v809 = vmul.f32 %v760, %v801
    %v810 = vld [vmem:[%s4] sm:$0xff]
    %v811 = vld [vmem:[%s4 + $0x8] sm:$0xff]
    %v812 = vld [vmem:[%s4 + $0x10] sm:$0xff]
    %v813 = vld [vmem:[%s4 + $0x18] sm:$0xff]
    %v814 = vrot.slane %v737, 6
    %v815 = vrot.slane %v738, 6
    %v816 = vsel %vm188, %v814, %v815
    %v817 = vrot.slane %v739, 6
    %v818 = vsel %vm188, %v815, %v817
    %v819 = vrot.slane %v740, 6
    %v820 = vsel %vm188, %v817, %v819
    %v821 = vrot.slane %v741, 6
    %v822 = vsel %vm188, %v819, %v821
    %v823 = vrot.slane %v742, 6
    %v824 = vsel %vm188, %v821, %v823
    %v831 = vsel %vm188, 0.0, %v814
    %833 = vset.pattern.permute.xlu0 0
    %834 = vperm.xlu0 %833, %v47
    %v835 = vpop.permute.xlu0 %834
    %838 = vset.pattern.permute.xlu0 0
    %839 = vperm.xlu0 %838, %v48
    %v840 = vpop.permute.xlu0 %839
    %843 = vset.pattern.permute.xlu0 0
    %844 = vperm.xlu0 %843, %v49
    %v845 = vpop.permute.xlu0 %844
    %848 = vset.pattern.permute.xlu0 0
    %849 = vperm.xlu0 %848, %v50
    %v850 = vpop.permute.xlu0 %849
    %853 = vset.pattern.permute.xlu0 0
    %854 = vperm.xlu0 %853, %v51
    %v855 = vpop.permute.xlu0 %854
    %858 = vset.pattern.permute.xlu0 0
    %859 = vperm.xlu0 %858, %v52
    %v860 = vpop.permute.xlu0 %859
    %863 = vset.pattern.permute.xlu0 0
    %864 = vperm.xlu0 %863, %v53
    %v865 = vpop.permute.xlu0 %864
    %v867 = vmul.f32 %v835, 0.0
    %v868 = vmul.f32 %v831, %v840
    %v869 = vmul.f32 %v816, %v845
    %v870 = vmul.f32 %v818, %v850
    %v871 = vmul.f32 %v820, %v855
    %v872 = vmul.f32 %v822, %v860
    %v873 = vmul.f32 %v824, %v865
    %s874 = scalar_lea.vmem %s4, 32
    %v875 = vld [vmem:[%s874] sm:$0xff]
    %v876 = vld [vmem:[%s874 + $0x8] sm:$0xff]
    %v877 = vld [vmem:[%s874 + $0x10] sm:$0xff]
    %v878 = vld [vmem:[%s874 + $0x18] sm:$0xff]
    %vm879 = vcmask 261120
    %v881 = vsel %vm879, %v867, 0
    %v884 = vsel %vm879, %v868, 0
    %v887 = vsel %vm879, %v869, 0
    %v890 = vsel %vm879, %v870, 0
    %v893 = vsel %vm879, %v871, 0
    %v896 = vsel %vm879, %v872, 0
    %v899 = vsel %vm879, %v873, 0
    %901 = vmatpush.msra.mxu0 0.0
    %902 = vmatpush.msra.mxu0 0.0
    %903 = vmatpush.msra.mxu0 0.0
    %904 = vmatpush.msra.mxu0 0.0
    %905 = vmatpush.msra.mxu0 0.0
    %906 = vmatpush.msra.mxu0 0.0
    %907 = vmatpush.msra.mxu0 0.0
    %908 = vmatpush.msra.mxu0 0.0
    %909 = vmatpush.msra.mxu0 0.0
    %910 = vmatpush.msra.mxu0 0.0
    %911 = vmatpush.msra.mxu0 0.0
    %912 = vmatpush.msra.mxu0 0.0
    %913 = vmatpush.msra.mxu0 %v878
    %914 = vmatpush.msra.mxu0 %v877
    %915 = vmatpush.msra.mxu0 %v876
    %916 = vmatpush.msra.mxu0 %v875
    %917 = vmatmul.f32.gmra.mxu0 %v881
    %v918 = vpop.f32.mrf.mxu0
    %v919 = vadd.f32 0.0, %v918
    %920 = vmatmul.f32.gmra.mxu0 %v884
    %v921 = vpop.f32.mrf.mxu0
    %v922 = vadd.f32 0.0, %v921
    %923 = vmatmul.f32.gmra.mxu0 %v887
    %v924 = vpop.f32.mrf.mxu0
    %v925 = vadd.f32 0.0, %v924
    %926 = vmatmul.f32.gmra.mxu0 %v890
    %v927 = vpop.f32.mrf.mxu0
    %v928 = vadd.f32 0.0, %v927
    %929 = vmatmul.f32.gmra.mxu0 %v893
    %v930 = vpop.f32.mrf.mxu0
    %v931 = vadd.f32 0.0, %v930
    %932 = vmatmul.f32.gmra.mxu0 %v896
    %v933 = vpop.f32.mrf.mxu0
    %v934 = vadd.f32 0.0, %v933
    %935 = vmatmul.f32.gmra.mxu0 %v899
    %v936 = vpop.f32.mrf.mxu0
    %v937 = vadd.f32 0.0, %v936
    %938 = vdwg.mxu0
    %v940 = vsel %vm879, %v803, 0
    %v943 = vsel %vm879, %v804, 0
    %v946 = vsel %vm879, %v805, 0
    %v949 = vsel %vm879, %v806, 0
    %v952 = vsel %vm879, %v807, 0
    %v955 = vsel %vm879, %v808, 0
    %v958 = vsel %vm879, %v809, 0
    %960 = vmatpush.msra.mxu0 0.0
    %961 = vmatpush.msra.mxu0 0.0
    %962 = vmatpush.msra.mxu0 0.0
    %963 = vmatpush.msra.mxu0 0.0
    %964 = vmatpush.msra.mxu0 0.0
    %965 = vmatpush.msra.mxu0 0.0
    %966 = vmatpush.msra.mxu0 0.0
    %967 = vmatpush.msra.mxu0 0.0
    %968 = vmatpush.msra.mxu0 0.0
    %969 = vmatpush.msra.mxu0 0.0
    %970 = vmatpush.msra.mxu0 0.0
    %971 = vmatpush.msra.mxu0 0.0
    %972 = vmatpush.msra.mxu0 %v813
    %973 = vmatpush.msra.mxu0 %v812
    %974 = vmatpush.msra.mxu0 %v811
    %975 = vmatpush.msra.mxu0 %v810
    %976 = vmatmul.f32.gmra.mxu0 %v940
    %v977 = vpop.f32.mrf.mxu0
    %v978 = vadd.f32 %v919, %v977
    %979 = vmatmul.f32.gmra.mxu0 %v943
    %v980 = vpop.f32.mrf.mxu0
    %v981 = vadd.f32 %v922, %v980
    %982 = vmatmul.f32.gmra.mxu0 %v946
    %v983 = vpop.f32.mrf.mxu0
    %v984 = vadd.f32 %v925, %v983
    %985 = vmatmul.f32.gmra.mxu0 %v949
    %v986 = vpop.f32.mrf.mxu0
    %v987 = vadd.f32 %v928, %v986
    %988 = vmatmul.f32.gmra.mxu0 %v952
    %v989 = vpop.f32.mrf.mxu0
    %v990 = vadd.f32 %v931, %v989
    %991 = vmatmul.f32.gmra.mxu0 %v955
    %v992 = vpop.f32.mrf.mxu0
    %v993 = vadd.f32 %v934, %v992
    %994 = vmatmul.f32.gmra.mxu0 %v958
    %v995 = vpop.f32.mrf.mxu0
    %v996 = vadd.f32 %v937, %v995
    %997 = vdwg.mxu0
    %999 = vset.pattern.permute.xlu0 0
    %1000 = vperm.xlu0 %999, %v54
    %v1001 = vpop.permute.xlu0 %1000
    %1004 = vset.pattern.permute.xlu0 0
    %1005 = vperm.xlu0 %1004, %v55
    %v1006 = vpop.permute.xlu0 %1005
    %1009 = vset.pattern.permute.xlu0 0
    %1010 = vperm.xlu0 %1009, %v56
    %v1011 = vpop.permute.xlu0 %1010
    %1014 = vset.pattern.permute.xlu0 0
    %1015 = vperm.xlu0 %1014, %v57
    %v1016 = vpop.permute.xlu0 %1015
    %1019 = vset.pattern.permute.xlu0 0
    %1020 = vperm.xlu0 %1019, %v58
    %v1021 = vpop.permute.xlu0 %1020
    %1024 = vset.pattern.permute.xlu0 0
    %1025 = vperm.xlu0 %1024, %v59
    %v1026 = vpop.permute.xlu0 %1025
    %1029 = vset.pattern.permute.xlu0 0
    %1030 = vperm.xlu0 %1029, %v60
    %v1031 = vpop.permute.xlu0 %1030
    %v1033 = vmul.f32 %v1001, 0.0
    %v1034 = vmul.f32 %v737, %v1006
    %v1035 = vmul.f32 %v738, %v1011
    %v1036 = vmul.f32 %v739, %v1016
    %v1037 = vmul.f32 %v740, %v1021
    %v1038 = vmul.f32 %v741, %v1026
    %v1039 = vmul.f32 %v742, %v1031
    %s1040 = scalar_lea.vmem %s4, 64
    %v1041 = vld [vmem:[%s1040] sm:$0xff]
    %v1042 = vld [vmem:[%s1040 + $0x8] sm:$0xff]
    %v1043 = vld [vmem:[%s1040 + $0x10] sm:$0xff]
    %v1044 = vld [vmem:[%s1040 + $0x18] sm:$0xff]
    %v1046 = vsel %vm879, %v1033, 0
    %v1049 = vsel %vm879, %v1034, 0
    %v1052 = vsel %vm879, %v1035, 0
    %v1055 = vsel %vm879, %v1036, 0
    %v1058 = vsel %vm879, %v1037, 0
    %v1061 = vsel %vm879, %v1038, 0
    %v1064 = vsel %vm879, %v1039, 0
    %1066 = vmatpush.msra.mxu0 0.0
    %1067 = vmatpush.msra.mxu0 0.0
    %1068 = vmatpush.msra.mxu0 0.0
    %1069 = vmatpush.msra.mxu0 0.0
    %1070 = vmatpush.msra.mxu0 0.0
    %1071 = vmatpush.msra.mxu0 0.0
    %1072 = vmatpush.msra.mxu0 0.0
    %1073 = vmatpush.msra.mxu0 0.0
    %1074 = vmatpush.msra.mxu0 0.0
    %1075 = vmatpush.msra.mxu0 0.0
    %1076 = vmatpush.msra.mxu0 0.0
    %1077 = vmatpush.msra.mxu0 0.0
    %1078 = vmatpush.msra.mxu0 %v1044
    %1079 = vmatpush.msra.mxu0 %v1043
    %1080 = vmatpush.msra.mxu0 %v1042
    %1081 = vmatpush.msra.mxu0 %v1041
    %1082 = vmatmul.f32.gmra.mxu0 %v1046
    %v1083 = vpop.f32.mrf.mxu0
    %v1084 = vadd.f32 0.0, %v1083
    %1085 = vmatmul.f32.gmra.mxu0 %v1049
    %v1086 = vpop.f32.mrf.mxu0
    %v1087 = vadd.f32 0.0, %v1086
    %1088 = vmatmul.f32.gmra.mxu0 %v1052
    %v1089 = vpop.f32.mrf.mxu0
    %v1090 = vadd.f32 0.0, %v1089
    %1091 = vmatmul.f32.gmra.mxu0 %v1055
    %v1092 = vpop.f32.mrf.mxu0
    %v1093 = vadd.f32 0.0, %v1092
    %1094 = vmatmul.f32.gmra.mxu0 %v1058
    %v1095 = vpop.f32.mrf.mxu0
    %v1096 = vadd.f32 0.0, %v1095
    %1097 = vmatmul.f32.gmra.mxu0 %v1061
    %v1098 = vpop.f32.mrf.mxu0
    %v1099 = vadd.f32 0.0, %v1098
    %1100 = vmatmul.f32.gmra.mxu0 %v1064
    %v1101 = vpop.f32.mrf.mxu0
    %v1102 = vadd.f32 0.0, %v1101
    %1103 = vdwg.mxu0
    %v1104 = vadd.f32 %v978, %v1084
    %v1105 = vadd.f32 %v981, %v1087
    %v1106 = vadd.f32 %v984, %v1090
    %v1107 = vadd.f32 %v987, %v1093
    %v1108 = vadd.f32 %v990, %v1096
    %v1109 = vadd.f32 %v993, %v1099
    %v1110 = vadd.f32 %v996, %v1102
    %v1112 = vrot.slane %v743, 6
    %v1113 = vsel %vm188, %v823, %v1112
    %1116 = vset.pattern.permute.xlu0 0
    %1117 = vperm.xlu0 %1116, %v61
    %v1118 = vpop.permute.xlu0 %1117
    %1121 = vset.pattern.permute.xlu0 0
    %1122 = vperm.xlu0 %1121, %v62
    %v1123 = vpop.permute.xlu0 %1122
    %1126 = vset.pattern.permute.xlu0 0
    %1127 = vperm.xlu0 %1126, %v63
    %v1128 = vpop.permute.xlu0 %1127
    %1131 = vset.pattern.permute.xlu0 0
    %1132 = vperm.xlu0 %1131, %v64
    %v1133 = vpop.permute.xlu0 %1132
    %1136 = vset.pattern.permute.xlu0 0
    %1137 = vperm.xlu0 %1136, %v65
    %v1138 = vpop.permute.xlu0 %1137
    %1141 = vset.pattern.permute.xlu0 0
    %1142 = vperm.xlu0 %1141, %v66
    %v1143 = vpop.permute.xlu0 %1142
    %1146 = vset.pattern.permute.xlu0 0
    %1147 = vperm.xlu0 %1146, %v67
    %v1148 = vpop.permute.xlu0 %1147
    %v1150 = vmul.f32 %v831, %v1118
    %v1151 = vmul.f32 %v816, %v1123
    %v1152 = vmul.f32 %v818, %v1128
    %v1153 = vmul.f32 %v820, %v1133
    %v1154 = vmul.f32 %v822, %v1138
    %v1155 = vmul.f32 %v824, %v1143
    %v1156 = vmul.f32 %v1113, %v1148
    %s1157 = scalar_lea.vmem %s4, 96
    %v1158 = vld [vmem:[%s1157] sm:$0xff]
    %v1159 = vld [vmem:[%s1157 + $0x8] sm:$0xff]
    %v1160 = vld [vmem:[%s1157 + $0x10] sm:$0xff]
    %v1161 = vld [vmem:[%s1157 + $0x18] sm:$0xff]
    %v1163 = vsel %vm879, %v1150, 0
    %v1166 = vsel %vm879, %v1151, 0
    %v1169 = vsel %vm879, %v1152, 0
    %v1172 = vsel %vm879, %v1153, 0
    %v1175 = vsel %vm879, %v1154, 0
    %v1178 = vsel %vm879, %v1155, 0
    %v1181 = vsel %vm879, %v1156, 0
    %1183 = vmatpush.msra.mxu0 0.0
    %1184 = vmatpush.msra.mxu0 0.0
    %1185 = vmatpush.msra.mxu0 0.0
    %1186 = vmatpush.msra.mxu0 0.0
    %1187 = vmatpush.msra.mxu0 0.0
    %1188 = vmatpush.msra.mxu0 0.0
    %1189 = vmatpush.msra.mxu0 0.0
    %1190 = vmatpush.msra.mxu0 0.0
    %1191 = vmatpush.msra.mxu0 0.0
    %1192 = vmatpush.msra.mxu0 0.0
    %1193 = vmatpush.msra.mxu0 0.0
    %1194 = vmatpush.msra.mxu0 0.0
    %1195 = vmatpush.msra.mxu0 %v1161
    %1196 = vmatpush.msra.mxu0 %v1160
    %1197 = vmatpush.msra.mxu0 %v1159
    %1198 = vmatpush.msra.mxu0 %v1158
    %1199 = vmatmul.f32.gmra.mxu0 %v1163
    %v1200 = vpop.f32.mrf.mxu0
    %v1201 = vadd.f32 0.0, %v1200
    %1202 = vmatmul.f32.gmra.mxu0 %v1166
    %v1203 = vpop.f32.mrf.mxu0
    %v1204 = vadd.f32 0.0, %v1203
    %1205 = vmatmul.f32.gmra.mxu0 %v1169
    %v1206 = vpop.f32.mrf.mxu0
    %v1207 = vadd.f32 0.0, %v1206
    %1208 = vmatmul.f32.gmra.mxu0 %v1172
    %v1209 = vpop.f32.mrf.mxu0
    %v1210 = vadd.f32 0.0, %v1209
    %1211 = vmatmul.f32.gmra.mxu0 %v1175
    %v1212 = vpop.f32.mrf.mxu0
    %v1213 = vadd.f32 0.0, %v1212
    %1214 = vmatmul.f32.gmra.mxu0 %v1178
    %v1215 = vpop.f32.mrf.mxu0
    %v1216 = vadd.f32 0.0, %v1215
    %1217 = vmatmul.f32.gmra.mxu0 %v1181
    %v1218 = vpop.f32.mrf.mxu0
    %v1219 = vadd.f32 0.0, %v1218
    %1220 = vdwg.mxu0
    %v1221 = vadd.f32 %v1104, %v1201
    %v1222 = vadd.f32 %v1105, %v1204
    %v1223 = vadd.f32 %v1106, %v1207
    %v1224 = vadd.f32 %v1107, %v1210
    %v1225 = vadd.f32 %v1108, %v1213
    %v1226 = vadd.f32 %v1109, %v1216
    %v1227 = vadd.f32 %v1110, %v1219
    %1229 = vset.pattern.permute.xlu0 0
    %1230 = vperm.xlu0 %1229, %v68
    %v1231 = vpop.permute.xlu0 %1230
    %1234 = vset.pattern.permute.xlu0 0
    %1235 = vperm.xlu0 %1234, %v69
    %v1236 = vpop.permute.xlu0 %1235
    %1239 = vset.pattern.permute.xlu0 0
    %1240 = vperm.xlu0 %1239, %v70
    %v1241 = vpop.permute.xlu0 %1240
    %1244 = vset.pattern.permute.xlu0 0
    %1245 = vperm.xlu0 %1244, %v71
    %v1246 = vpop.permute.xlu0 %1245
    %1249 = vset.pattern.permute.xlu0 0
    %1250 = vperm.xlu0 %1249, %v72
    %v1251 = vpop.permute.xlu0 %1250
    %1254 = vset.pattern.permute.xlu0 0
    %1255 = vperm.xlu0 %1254, %v73
    %v1256 = vpop.permute.xlu0 %1255
    %1259 = vset.pattern.permute.xlu0 0
    %1260 = vperm.xlu0 %1259, %v74
    %v1261 = vpop.permute.xlu0 %1260
    %v1263 = vmul.f32 %v737, %v1231
    %v1264 = vmul.f32 %v738, %v1236
    %v1265 = vmul.f32 %v739, %v1241
    %v1266 = vmul.f32 %v740, %v1246
    %v1267 = vmul.f32 %v741, %v1251
    %v1268 = vmul.f32 %v742, %v1256
    %v1269 = vmul.f32 %v743, %v1261
    %s1270 = scalar_lea.vmem %s4, 128
    %v1271 = vld [vmem:[%s1270] sm:$0xff]
    %v1272 = vld [vmem:[%s1270 + $0x8] sm:$0xff]
    %v1273 = vld [vmem:[%s1270 + $0x10] sm:$0xff]
    %v1274 = vld [vmem:[%s1270 + $0x18] sm:$0xff]
    %v1276 = vsel %vm879, %v1263, 0
    %v1279 = vsel %vm879, %v1264, 0
    %v1282 = vsel %vm879, %v1265, 0
    %v1285 = vsel %vm879, %v1266, 0
    %v1288 = vsel %vm879, %v1267, 0
    %v1291 = vsel %vm879, %v1268, 0
    %v1294 = vsel %vm879, %v1269, 0
    %1296 = vmatpush.msra.mxu0 0.0
    %1297 = vmatpush.msra.mxu0 0.0
    %1298 = vmatpush.msra.mxu0 0.0
    %1299 = vmatpush.msra.mxu0 0.0
    %1300 = vmatpush.msra.mxu0 0.0
    %1301 = vmatpush.msra.mxu0 0.0
    %1302 = vmatpush.msra.mxu0 0.0
    %1303 = vmatpush.msra.mxu0 0.0
    %1304 = vmatpush.msra.mxu0 0.0
    %1305 = vmatpush.msra.mxu0 0.0
    %1306 = vmatpush.msra.mxu0 0.0
    %1307 = vmatpush.msra.mxu0 0.0
    %1308 = vmatpush.msra.mxu0 %v1274
    %1309 = vmatpush.msra.mxu0 %v1273
    %1310 = vmatpush.msra.mxu0 %v1272
    %1311 = vmatpush.msra.mxu0 %v1271
    %1312 = vmatmul.f32.gmra.mxu0 %v1276
    %v1313 = vpop.f32.mrf.mxu0
    %v1314 = vadd.f32 0.0, %v1313
    %1315 = vmatmul.f32.gmra.mxu0 %v1279
    %v1316 = vpop.f32.mrf.mxu0
    %v1317 = vadd.f32 0.0, %v1316
    %1318 = vmatmul.f32.gmra.mxu0 %v1282
    %v1319 = vpop.f32.mrf.mxu0
    %v1320 = vadd.f32 0.0, %v1319
    %1321 = vmatmul.f32.gmra.mxu0 %v1285
    %v1322 = vpop.f32.mrf.mxu0
    %v1323 = vadd.f32 0.0, %v1322
    %1324 = vmatmul.f32.gmra.mxu0 %v1288
    %v1325 = vpop.f32.mrf.mxu0
    %v1326 = vadd.f32 0.0, %v1325
    %1327 = vmatmul.f32.gmra.mxu0 %v1291
    %v1328 = vpop.f32.mrf.mxu0
    %v1329 = vadd.f32 0.0, %v1328
    %1330 = vmatmul.f32.gmra.mxu0 %v1294
    %v1331 = vpop.f32.mrf.mxu0
    %v1332 = vadd.f32 0.0, %v1331
    %1333 = vdwg.mxu0
    %v1334 = vadd.f32 %v1221, %v1314
    %v1335 = vadd.f32 %v1222, %v1317
    %v1336 = vadd.f32 %v1223, %v1320
    %v1337 = vadd.f32 %v1224, %v1323
    %v1338 = vadd.f32 %v1225, %v1326
    %v1339 = vadd.f32 %v1226, %v1329
    %v1340 = vadd.f32 %v1227, %v1332
    %v1341 = vrot.slane %v737, 2
    %v1342 = vrot.slane %v738, 2
    %v1343 = vsel %vm455, %v1341, %v1342
    %v1344 = vrot.slane %v739, 2
    %v1345 = vsel %vm455, %v1342, %v1344
    %v1346 = vrot.slane %v740, 2
    %v1347 = vsel %vm455, %v1344, %v1346
    %v1348 = vrot.slane %v741, 2
    %v1349 = vsel %vm455, %v1346, %v1348
    %v1350 = vrot.slane %v742, 2
    %v1351 = vsel %vm455, %v1348, %v1350
    %v1352 = vrot.slane %v743, 2
    %v1353 = vsel %vm455, %v1350, %v1352
    %v1361 = vsel %vm455, %v1352, 0.0
    %1363 = vset.pattern.permute.xlu0 0
    %1364 = vperm.xlu0 %1363, %v75
    %v1365 = vpop.permute.xlu0 %1364
    %1368 = vset.pattern.permute.xlu0 0
    %1369 = vperm.xlu0 %1368, %v76
    %v1370 = vpop.permute.xlu0 %1369
    %1373 = vset.pattern.permute.xlu0 0
    %1374 = vperm.xlu0 %1373, %v77
    %v1375 = vpop.permute.xlu0 %1374
    %1378 = vset.pattern.permute.xlu0 0
    %1379 = vperm.xlu0 %1378, %v78
    %v1380 = vpop.permute.xlu0 %1379
    %1383 = vset.pattern.permute.xlu0 0
    %1384 = vperm.xlu0 %1383, %v79
    %v1385 = vpop.permute.xlu0 %1384
    %1388 = vset.pattern.permute.xlu0 0
    %1389 = vperm.xlu0 %1388, %v80
    %v1390 = vpop.permute.xlu0 %1389
    %1393 = vset.pattern.permute.xlu0 0
    %1394 = vperm.xlu0 %1393, %v81
    %v1395 = vpop.permute.xlu0 %1394
    %v1397 = vmul.f32 %v1343, %v1365
    %v1398 = vmul.f32 %v1345, %v1370
    %v1399 = vmul.f32 %v1347, %v1375
    %v1400 = vmul.f32 %v1349, %v1380
    %v1401 = vmul.f32 %v1351, %v1385
    %v1402 = vmul.f32 %v1353, %v1390
    %v1403 = vmul.f32 %v1361, %v1395
    %s1404 = scalar_lea.vmem %s4, 160
    %v1405 = vld [vmem:[%s1404] sm:$0xff]
    %v1406 = vld [vmem:[%s1404 + $0x8] sm:$0xff]
    %v1407 = vld [vmem:[%s1404 + $0x10] sm:$0xff]
    %v1408 = vld [vmem:[%s1404 + $0x18] sm:$0xff]
    %v1410 = vsel %vm879, %v1397, 0
    %v1413 = vsel %vm879, %v1398, 0
    %v1416 = vsel %vm879, %v1399, 0
    %v1419 = vsel %vm879, %v1400, 0
    %v1422 = vsel %vm879, %v1401, 0
    %v1425 = vsel %vm879, %v1402, 0
    %v1428 = vsel %vm879, %v1403, 0
    %1430 = vmatpush.msra.mxu0 0.0
    %1431 = vmatpush.msra.mxu0 0.0
    %1432 = vmatpush.msra.mxu0 0.0
    %1433 = vmatpush.msra.mxu0 0.0
    %1434 = vmatpush.msra.mxu0 0.0
    %1435 = vmatpush.msra.mxu0 0.0
    %1436 = vmatpush.msra.mxu0 0.0
    %1437 = vmatpush.msra.mxu0 0.0
    %1438 = vmatpush.msra.mxu0 0.0
    %1439 = vmatpush.msra.mxu0 0.0
    %1440 = vmatpush.msra.mxu0 0.0
    %1441 = vmatpush.msra.mxu0 0.0
    %1442 = vmatpush.msra.mxu0 %v1408
    %1443 = vmatpush.msra.mxu0 %v1407
    %1444 = vmatpush.msra.mxu0 %v1406
    %1445 = vmatpush.msra.mxu0 %v1405
    %1446 = vmatmul.f32.gmra.mxu0 %v1410
    %v1447 = vpop.f32.mrf.mxu0
    %v1448 = vadd.f32 0.0, %v1447
    %1449 = vmatmul.f32.gmra.mxu0 %v1413
    %v1450 = vpop.f32.mrf.mxu0
    %v1451 = vadd.f32 0.0, %v1450
    %1452 = vmatmul.f32.gmra.mxu0 %v1416
    %v1453 = vpop.f32.mrf.mxu0
    %v1454 = vadd.f32 0.0, %v1453
    %1455 = vmatmul.f32.gmra.mxu0 %v1419
    %v1456 = vpop.f32.mrf.mxu0
    %v1457 = vadd.f32 0.0, %v1456
    %1458 = vmatmul.f32.gmra.mxu0 %v1422
    %v1459 = vpop.f32.mrf.mxu0
    %v1460 = vadd.f32 0.0, %v1459
    %1461 = vmatmul.f32.gmra.mxu0 %v1425
    %v1462 = vpop.f32.mrf.mxu0
    %v1463 = vadd.f32 0.0, %v1462
    %1464 = vmatmul.f32.gmra.mxu0 %v1428
    %v1465 = vpop.f32.mrf.mxu0
    %v1466 = vadd.f32 0.0, %v1465
    %1467 = vdwg.mxu0
    %v1468 = vadd.f32 %v1334, %v1448
    %v1469 = vadd.f32 %v1335, %v1451
    %v1470 = vadd.f32 %v1336, %v1454
    %v1471 = vadd.f32 %v1337, %v1457
    %v1472 = vadd.f32 %v1338, %v1460
    %v1473 = vadd.f32 %v1339, %v1463
    %v1474 = vadd.f32 %v1340, %v1466
    %1476 = vset.pattern.permute.xlu0 0
    %1477 = vperm.xlu0 %1476, %v82
    %v1478 = vpop.permute.xlu0 %1477
    %1481 = vset.pattern.permute.xlu0 0
    %1482 = vperm.xlu0 %1481, %v83
    %v1483 = vpop.permute.xlu0 %1482
    %1486 = vset.pattern.permute.xlu0 0
    %1487 = vperm.xlu0 %1486, %v84
    %v1488 = vpop.permute.xlu0 %1487
    %1491 = vset.pattern.permute.xlu0 0
    %1492 = vperm.xlu0 %1491, %v85
    %v1493 = vpop.permute.xlu0 %1492
    %1496 = vset.pattern.permute.xlu0 0
    %1497 = vperm.xlu0 %1496, %v86
    %v1498 = vpop.permute.xlu0 %1497
    %1501 = vset.pattern.permute.xlu0 0
    %1502 = vperm.xlu0 %1501, %v87
    %v1503 = vpop.permute.xlu0 %1502
    %1506 = vset.pattern.permute.xlu0 0
    %1507 = vperm.xlu0 %1506, %v88
    %v1508 = vpop.permute.xlu0 %1507
    %v1510 = vmul.f32 %v738, %v1478
    %v1511 = vmul.f32 %v739, %v1483
    %v1512 = vmul.f32 %v740, %v1488
    %v1513 = vmul.f32 %v741, %v1493
    %v1514 = vmul.f32 %v742, %v1498
    %v1515 = vmul.f32 %v743, %v1503
    %v1516 = vmul.f32 %v1508, 0.0
    %s1517 = scalar_lea.vmem %s4, 192
    %v1518 = vld [vmem:[%s1517] sm:$0xff]
    %v1519 = vld [vmem:[%s1517 + $0x8] sm:$0xff]
    %v1520 = vld [vmem:[%s1517 + $0x10] sm:$0xff]
    %v1521 = vld [vmem:[%s1517 + $0x18] sm:$0xff]
    %v1523 = vsel %vm879, %v1510, 0
    %v1526 = vsel %vm879, %v1511, 0
    %v1529 = vsel %vm879, %v1512, 0
    %v1532 = vsel %vm879, %v1513, 0
    %v1535 = vsel %vm879, %v1514, 0
    %v1538 = vsel %vm879, %v1515, 0
    %v1541 = vsel %vm879, %v1516, 0
    %1543 = vmatpush.msra.mxu0 0.0
    %1544 = vmatpush.msra.mxu0 0.0
    %1545 = vmatpush.msra.mxu0 0.0
    %1546 = vmatpush.msra.mxu0 0.0
    %1547 = vmatpush.msra.mxu0 0.0
    %1548 = vmatpush.msra.mxu0 0.0
    %1549 = vmatpush.msra.mxu0 0.0
    %1550 = vmatpush.msra.mxu0 0.0
    %1551 = vmatpush.msra.mxu0 0.0
    %1552 = vmatpush.msra.mxu0 0.0
    %1553 = vmatpush.msra.mxu0 0.0
    %1554 = vmatpush.msra.mxu0 0.0
    %1555 = vmatpush.msra.mxu0 %v1521
    %1556 = vmatpush.msra.mxu0 %v1520
    %1557 = vmatpush.msra.mxu0 %v1519
    %1558 = vmatpush.msra.mxu0 %v1518
    %1559 = vmatmul.f32.gmra.mxu0 %v1523
    %v1560 = vpop.f32.mrf.mxu0
    %v1561 = vadd.f32 0.0, %v1560
    %1562 = vmatmul.f32.gmra.mxu0 %v1526
    %v1563 = vpop.f32.mrf.mxu0
    %v1564 = vadd.f32 0.0, %v1563
    %1565 = vmatmul.f32.gmra.mxu0 %v1529
    %v1566 = vpop.f32.mrf.mxu0
    %v1567 = vadd.f32 0.0, %v1566
    %1568 = vmatmul.f32.gmra.mxu0 %v1532
    %v1569 = vpop.f32.mrf.mxu0
    %v1570 = vadd.f32 0.0, %v1569
    %1571 = vmatmul.f32.gmra.mxu0 %v1535
    %v1572 = vpop.f32.mrf.mxu0
    %v1573 = vadd.f32 0.0, %v1572
    %1574 = vmatmul.f32.gmra.mxu0 %v1538
    %v1575 = vpop.f32.mrf.mxu0
    %v1576 = vadd.f32 0.0, %v1575
    %1577 = vmatmul.f32.gmra.mxu0 %v1541
    %v1578 = vpop.f32.mrf.mxu0
    %v1579 = vadd.f32 0.0, %v1578
    %1580 = vdwg.mxu0
    %v1581 = vadd.f32 %v1468, %v1561
    %v1582 = vadd.f32 %v1469, %v1564
    %v1583 = vadd.f32 %v1470, %v1567
    %v1584 = vadd.f32 %v1471, %v1570
    %v1585 = vadd.f32 %v1472, %v1573
    %v1586 = vadd.f32 %v1473, %v1576
    %v1587 = vadd.f32 %v1474, %v1579
    %1589 = vset.pattern.permute.xlu0 0
    %1590 = vperm.xlu0 %1589, %v89
    %v1591 = vpop.permute.xlu0 %1590
    %1594 = vset.pattern.permute.xlu0 0
    %1595 = vperm.xlu0 %1594, %v90
    %v1596 = vpop.permute.xlu0 %1595
    %1599 = vset.pattern.permute.xlu0 0
    %1600 = vperm.xlu0 %1599, %v91
    %v1601 = vpop.permute.xlu0 %1600
    %1604 = vset.pattern.permute.xlu0 0
    %1605 = vperm.xlu0 %1604, %v92
    %v1606 = vpop.permute.xlu0 %1605
    %1609 = vset.pattern.permute.xlu0 0
    %1610 = vperm.xlu0 %1609, %v93
    %v1611 = vpop.permute.xlu0 %1610
    %1614 = vset.pattern.permute.xlu0 0
    %1615 = vperm.xlu0 %1614, %v94
    %v1616 = vpop.permute.xlu0 %1615
    %1619 = vset.pattern.permute.xlu0 0
    %1620 = vperm.xlu0 %1619, %v95
    %v1621 = vpop.permute.xlu0 %1620
    %v1623 = vmul.f32 %v1345, %v1591
    %v1624 = vmul.f32 %v1347, %v1596
    %v1625 = vmul.f32 %v1349, %v1601
    %v1626 = vmul.f32 %v1351, %v1606
    %v1627 = vmul.f32 %v1353, %v1611
    %v1628 = vmul.f32 %v1361, %v1616
    %v1629 = vmul.f32 %v1621, 0.0
    %s1630 = scalar_lea.vmem %s4, 224
    %v1631 = vld [vmem:[%s1630] sm:$0xff]
    %v1632 = vld [vmem:[%s1630 + $0x8] sm:$0xff]
    %v1633 = vld [vmem:[%s1630 + $0x10] sm:$0xff]
    %v1634 = vld [vmem:[%s1630 + $0x18] sm:$0xff]
    %v1636 = vsel %vm879, %v1623, 0
    %v1639 = vsel %vm879, %v1624, 0
    %v1642 = vsel %vm879, %v1625, 0
    %v1645 = vsel %vm879, %v1626, 0
    %v1648 = vsel %vm879, %v1627, 0
    %v1651 = vsel %vm879, %v1628, 0
    %v1654 = vsel %vm879, %v1629, 0
    %1656 = vmatpush.msra.mxu0 0.0
    %1657 = vmatpush.msra.mxu0 0.0
    %1658 = vmatpush.msra.mxu0 0.0
    %1659 = vmatpush.msra.mxu0 0.0
    %1660 = vmatpush.msra.mxu0 0.0
    %1661 = vmatpush.msra.mxu0 0.0
    %1662 = vmatpush.msra.mxu0 0.0
    %1663 = vmatpush.msra.mxu0 0.0
    %1664 = vmatpush.msra.mxu0 0.0
    %1665 = vmatpush.msra.mxu0 0.0
    %1666 = vmatpush.msra.mxu0 0.0
    %1667 = vmatpush.msra.mxu0 0.0
    %1668 = vmatpush.msra.mxu0 %v1634
    %1669 = vmatpush.msra.mxu0 %v1633
    %1670 = vmatpush.msra.mxu0 %v1632
    %1671 = vmatpush.msra.mxu0 %v1631
    %1672 = vmatmul.f32.gmra.mxu0 %v1636
    %v1673 = vpop.f32.mrf.mxu0
    %v1674 = vadd.f32 0.0, %v1673
    %1675 = vmatmul.f32.gmra.mxu0 %v1639
    %v1676 = vpop.f32.mrf.mxu0
    %v1677 = vadd.f32 0.0, %v1676
    %1678 = vmatmul.f32.gmra.mxu0 %v1642
    %v1679 = vpop.f32.mrf.mxu0
    %v1680 = vadd.f32 0.0, %v1679
    %1681 = vmatmul.f32.gmra.mxu0 %v1645
    %v1682 = vpop.f32.mrf.mxu0
    %v1683 = vadd.f32 0.0, %v1682
    %1684 = vmatmul.f32.gmra.mxu0 %v1648
    %v1685 = vpop.f32.mrf.mxu0
    %v1686 = vadd.f32 0.0, %v1685
    %1687 = vmatmul.f32.gmra.mxu0 %v1651
    %v1688 = vpop.f32.mrf.mxu0
    %v1689 = vadd.f32 0.0, %v1688
    %1690 = vmatmul.f32.gmra.mxu0 %v1654
    %v1691 = vpop.f32.mrf.mxu0
    %v1692 = vadd.f32 0.0, %v1691
    %1693 = vdwg.mxu0
    %v1694 = vadd.f32 %v1581, %v1674
    %v1695 = vadd.f32 %v1582, %v1677
    %v1696 = vadd.f32 %v1583, %v1680
    %v1697 = vadd.f32 %v1584, %v1683
    %v1698 = vadd.f32 %v1585, %v1686
    %v1699 = vadd.f32 %v1586, %v1689
    %v1700 = vadd.f32 %v1587, %v1692
    %v1701 = vrot.slane %v743, 4
    %v1702 = vsel %vm109, %v759, %v1701
    %v1705 = vsel %vm109, %v1701, 0.0
    %1707 = vset.pattern.permute.xlu0 0
    %1708 = vperm.xlu0 %1707, %v96
    %v1709 = vpop.permute.xlu0 %1708
    %1712 = vset.pattern.permute.xlu0 0
    %1713 = vperm.xlu0 %1712, %v97
    %v1714 = vpop.permute.xlu0 %1713
    %1717 = vset.pattern.permute.xlu0 0
    %1718 = vperm.xlu0 %1717, %v98
    %v1719 = vpop.permute.xlu0 %1718
    %1722 = vset.pattern.permute.xlu0 0
    %1723 = vperm.xlu0 %1722, %v99
    %v1724 = vpop.permute.xlu0 %1723
    %1727 = vset.pattern.permute.xlu0 0
    %1728 = vperm.xlu0 %1727, %v100
    %v1729 = vpop.permute.xlu0 %1728
    %1732 = vset.pattern.permute.xlu0 0
    %1733 = vperm.xlu0 %1732, %v101
    %v1734 = vpop.permute.xlu0 %1733
    %1737 = vset.pattern.permute.xlu0 0
    %1738 = vperm.xlu0 %1737, %v102
    %v1739 = vpop.permute.xlu0 %1738
    %v1741 = vmul.f32 %v754, %v1709
    %v1742 = vmul.f32 %v756, %v1714
    %v1743 = vmul.f32 %v758, %v1719
    %v1744 = vmul.f32 %v760, %v1724
    %v1745 = vmul.f32 %v1702, %v1729
    %v1746 = vmul.f32 %v1705, %v1734
    %v1747 = vmul.f32 %v1739, 0.0
    %s1748 = scalar_lea.vmem %s4, 256
    %v1749 = vld [vmem:[%s1748] sm:$0xff]
    %v1750 = vld [vmem:[%s1748 + $0x8] sm:$0xff]
    %v1751 = vld [vmem:[%s1748 + $0x10] sm:$0xff]
    %v1752 = vld [vmem:[%s1748 + $0x18] sm:$0xff]
    %v1754 = vsel %vm879, %v1741, 0
    %v1757 = vsel %vm879, %v1742, 0
    %v1760 = vsel %vm879, %v1743, 0
    %v1763 = vsel %vm879, %v1744, 0
    %v1766 = vsel %vm879, %v1745, 0
    %v1769 = vsel %vm879, %v1746, 0
    %v1772 = vsel %vm879, %v1747, 0
    %1774 = vmatpush.msra.mxu0 0.0
    %1775 = vmatpush.msra.mxu0 0.0
    %1776 = vmatpush.msra.mxu0 0.0
    %1777 = vmatpush.msra.mxu0 0.0
    %1778 = vmatpush.msra.mxu0 0.0
    %1779 = vmatpush.msra.mxu0 0.0
    %1780 = vmatpush.msra.mxu0 0.0
    %1781 = vmatpush.msra.mxu0 0.0
    %1782 = vmatpush.msra.mxu0 0.0
    %1783 = vmatpush.msra.mxu0 0.0
    %1784 = vmatpush.msra.mxu0 0.0
    %1785 = vmatpush.msra.mxu0 0.0
    %1786 = vmatpush.msra.mxu0 %v1752
    %1787 = vmatpush.msra.mxu0 %v1751
    %1788 = vmatpush.msra.mxu0 %v1750
    %1789 = vmatpush.msra.mxu0 %v1749
    %1790 = vmatmul.f32.gmra.mxu0 %v1754
    %v1791 = vpop.f32.mrf.mxu0
    %v1792 = vadd.f32 0.0, %v1791
    %1793 = vmatmul.f32.gmra.mxu0 %v1757
    %v1794 = vpop.f32.mrf.mxu0
    %v1795 = vadd.f32 0.0, %v1794
    %1796 = vmatmul.f32.gmra.mxu0 %v1760
    %v1797 = vpop.f32.mrf.mxu0
    %v1798 = vadd.f32 0.0, %v1797
    %1799 = vmatmul.f32.gmra.mxu0 %v1763
    %v1800 = vpop.f32.mrf.mxu0
    %v1801 = vadd.f32 0.0, %v1800
    %1802 = vmatmul.f32.gmra.mxu0 %v1766
    %v1803 = vpop.f32.mrf.mxu0
    %v1804 = vadd.f32 0.0, %v1803
    %1805 = vmatmul.f32.gmra.mxu0 %v1769
    %v1806 = vpop.f32.mrf.mxu0
    %v1807 = vadd.f32 0.0, %v1806
    %1808 = vmatmul.f32.gmra.mxu0 %v1772
    %v1809 = vpop.f32.mrf.mxu0
    %v1810 = vadd.f32 0.0, %v1809
    %1811 = vdwg.mxu0
    %v1812 = vadd.f32 %v1694, %v1792
    %v1813 = vadd.f32 %v1695, %v1795
    %v1814 = vadd.f32 %v1696, %v1798
    %v1815 = vadd.f32 %v1697, %v1801
    %v1816 = vadd.f32 %v1698, %v1804
    %v1817 = vadd.f32 %v1699, %v1807
    %v1818 = vadd.f32 %v1700, %v1810
    %v1819 = vld [vmem:[%s5] sm:$0x1]
    %v1821 = vperm.slane %v1819, 0
    %v1823 = vadd.f32 %v1812, %v1821
    %v1824 = vadd.f32 %v1813, %v1821
    %v1825 = vadd.f32 %v1814, %v1821
    %v1826 = vadd.f32 %v1815, %v1821
    %v1827 = vadd.f32 %v1816, %v1821
    %v1828 = vadd.f32 %v1817, %v1821
    %v1829 = vadd.f32 %v1818, %v1821
    %v1830 = vmax.f32 %v1823, 0.0
    %v1831 = vmax.f32 %v1824, 0.0
    %v1832 = vmax.f32 %v1825, 0.0
    %v1833 = vmax.f32 %v1826, 0.0
    %v1834 = vmax.f32 %v1827, 0.0
    %v1835 = vmax.f32 %v1828, 0.0
    %v1836 = vmax.f32 %v1829, 0.0
    %v1837 = vld [vmem:[%s6] sm:$0xff]
    %v1838 = vld [vmem:[%s6 + $0x8] sm:$0xff]
    %v1839 = vld [vmem:[%s6 + $0x10] sm:$0xff]
    %v1840 = vld [vmem:[%s6 + $0x18] sm:$0xff]
    %v1841 = vld [vmem:[%s6 + $0x20] sm:$0xff]
    %v1842 = vld [vmem:[%s6 + $0x28] sm:$0xff]
    %v1843 = vld [vmem:[%s6 + $0x30] sm:$0xff]
    %v1844 = vmul.f32 %v1830, %v1837
    %v1845 = vmul.f32 %v1831, %v1838
    %v1846 = vmul.f32 %v1832, %v1839
    %v1847 = vmul.f32 %v1833, %v1840
    %v1848 = vmul.f32 %v1834, %v1841
    %v1849 = vmul.f32 %v1835, %v1842
    %v1850 = vmul.f32 %v1836, %v1843
    %vm1851 = vcmask 130048
    %v1852 = vsel %vm1851, %v1844, 0.0
    %1853 = vadd.xlane.f32.xlu0 %v1852
    %v1854 = vpop.xlane.xlu0 %1853
    %v1855 = vsel %vm1851, %v1845, 0.0
    %1856 = vadd.xlane.f32.xlu0 %v1855
    %v1857 = vpop.xlane.xlu0 %1856
    %v1858 = vsel %vm1851, %v1846, 0.0
    %1859 = vadd.xlane.f32.xlu0 %v1858
    %v1860 = vpop.xlane.xlu0 %1859
    %v1861 = vsel %vm1851, %v1847, 0.0
    %1862 = vadd.xlane.f32.xlu0 %v1861
    %v1863 = vpop.xlane.xlu0 %1862
    %v1864 = vsel %vm1851, %v1848, 0.0
    %1865 = vadd.xlane.f32.xlu0 %v1864
    %v1866 = vpop.xlane.xlu0 %1865
    %v1867 = vsel %vm1851, %v1849, 0.0
    %1868 = vadd.xlane.f32.xlu0 %v1867
    %v1869 = vpop.xlane.xlu0 %1868
    %v1870 = vsel %vm1851, %v1850, 0.0
    %1871 = vadd.xlane.f32.xlu0 %v1870
    %v1872 = vpop.xlane.xlu0 %1871
    %s1873 = scalar_lea.vmem %s6, 56
    %v1874 = vld [vmem:[%s1873] sm:$0xff]
    %v1875 = vld [vmem:[%s1873 + $0x8] sm:$0xff]
    %v1876 = vld [vmem:[%s1873 + $0x10] sm:$0xff]
    %v1877 = vld [vmem:[%s1873 + $0x18] sm:$0xff]
    %v1878 = vld [vmem:[%s1873 + $0x20] sm:$0xff]
    %v1879 = vld [vmem:[%s1873 + $0x28] sm:$0xff]
    %v1880 = vld [vmem:[%s1873 + $0x30] sm:$0xff]
    %v1881 = vmul.f32 %v1830, %v1874
    %v1882 = vmul.f32 %v1831, %v1875
    %v1883 = vmul.f32 %v1832, %v1876
    %v1884 = vmul.f32 %v1833, %v1877
    %v1885 = vmul.f32 %v1834, %v1878
    %v1886 = vmul.f32 %v1835, %v1879
    %v1887 = vmul.f32 %v1836, %v1880
    %v1888 = vsel %vm1851, %v1881, 0.0
    %1889 = vadd.xlane.f32.xlu0 %v1888
    %v1890 = vpop.xlane.xlu0 %1889
    %v1891 = vsel %vm1851, %v1882, 0.0
    %1892 = vadd.xlane.f32.xlu0 %v1891
    %v1893 = vpop.xlane.xlu0 %1892
    %v1894 = vsel %vm1851, %v1883, 0.0
    %1895 = vadd.xlane.f32.xlu0 %v1894
    %v1896 = vpop.xlane.xlu0 %1895
    %v1897 = vsel %vm1851, %v1884, 0.0
    %1898 = vadd.xlane.f32.xlu0 %v1897
    %v1899 = vpop.xlane.xlu0 %1898
    %v1900 = vsel %vm1851, %v1885, 0.0
    %1901 = vadd.xlane.f32.xlu0 %v1900
    %v1902 = vpop.xlane.xlu0 %1901
    %v1903 = vsel %vm1851, %v1886, 0.0
    %1904 = vadd.xlane.f32.xlu0 %v1903
    %v1905 = vpop.xlane.xlu0 %1904
    %v1906 = vsel %vm1851, %v1887, 0.0
    %1907 = vadd.xlane.f32.xlu0 %v1906
    %v1908 = vpop.xlane.xlu0 %1907
    %vm1909 = vcmask 7168
    %v1910 = vsel %vm1909, %v1854, %v1890
    %v1911 = vsel %vm1909, %v1857, %v1893
    %v1912 = vsel %vm1909, %v1860, %v1896
    %v1913 = vsel %vm1909, %v1863, %v1899
    %v1914 = vsel %vm1909, %v1866, %v1902
    %v1915 = vsel %vm1909, %v1869, %v1905
    %v1916 = vsel %vm1909, %v1872, %v1908
    %v1917 = vld [vmem:[%s8] sm:$0x3]
    %v1918 = vld [vmem:[%s7] sm:$0x1]
    %v1920 = vperm.slane %v1918, 0
    %vm1922 = vcmask 457728
    %v1924 = vsel %vm1922, %v1917, 0
    %1926 = vmatpush.msra.mxu0 0.0
    %1927 = vmatpush.msra.mxu0 0.0
    %1928 = vmatpush.msra.mxu0 0.0
    %1929 = vmatpush.msra.mxu0 0.0
    %1930 = vmatpush.msra.mxu0 0.0
    %1931 = vmatpush.msra.mxu0 0.0
    %1932 = vmatpush.msra.mxu0 0.0
    %1933 = vmatpush.msra.mxu0 0.0
    %1934 = vmatpush.msra.mxu0 0.0
    %1935 = vmatpush.msra.mxu0 %v1916
    %1936 = vmatpush.msra.mxu0 %v1915
    %1937 = vmatpush.msra.mxu0 %v1914
    %1938 = vmatpush.msra.mxu0 %v1913
    %1939 = vmatpush.msra.mxu0 %v1912
    %1940 = vmatpush.msra.mxu0 %v1911
    %1941 = vmatpush.msra.mxu0 %v1910
    %1942 = vmatmul.f32.gmra.mxu0 %v1924
    %v1943 = vpop.f32.mrf.mxu0
    %v1944 = vadd.f32 %v1920, %v1943
    %1945 = vdwg.mxu0
    %vm1946 = vcmask 9216
    %1947 = vst.msk [vmem:[#allocation2] sm:$0x3] %vm1946, %v1944
    // Predicated region
    $region38: #{demosaic_cnn_forward.1} parent=1 // pred_check
      _
    $region39: #{demosaic_cnn_forward.1} parent=1 // pred_check_branch
      %1949 = sbr.rel (0) target = $region41
    $region40: #{demosaic_cnn_forward.1} parent=1 // pred_region
      %1951 = vsyncadd [#allocation3], 0
      %s1953 = sshll.u32 [#allocation2], 4
      %s1954 = int_to_ptr.vmem [resolvable:$true] %s1953
      %s1955 = sshll.u32 %s9, 4
      %s1956 = int_to_ptr.hbm [resolvable:$true] %s1955
      %1958 = dma.vmem_to_hbm [thread:$0]  %s1954, 32, %s1956, [#allocation3]
    $region41: #{demosaic_cnn_forward.1} parent=1 // pred_fallthru
      _
    // Predicated region
    $region42: #{demosaic_cnn_forward.1} parent=1 // pred_check
      _
    $region43: #{demosaic_cnn_forward.1} parent=1 // pred_check_branch
      %1960 = sbr.rel (0) target = $region45
    $region44: #{demosaic_cnn_forward.1} parent=1 // pred_region
      %1962 = dma.done [#allocation3], 32
    $region45: #{demosaic_cnn_forward.1} parent=1 // pred_fallthru
      _
    %1963 = vsyncpa [#allocation3], 1

</llo_original>
